<compile_context>
chip_gen: v7x
topology: tpu7x:2x2x1
jax: 0.10.0
libtpu: 0.0.40
codegen_flags: <defaults>
</compile_context>

<pallas_src>
import jax
import jax.numpy as jnp
from jax.experimental import pallas as pl
from jax.experimental.pallas import tpu as pltpu


# ---------------------------------------------------------------------------
# Kernel A (one per branch): fused map_builder('sum') + semantic-IDF KL loss.
# Grid over batch tiles; (1,1) output block is resident (constant index map)
# and accumulates the KL sum across the grid (reduction axis -> 'arbitrary').
# ---------------------------------------------------------------------------
def _branch_kl_kernel(idf_ref, dense_ref, sparse_ref, emb_ref, out_ref):
    step = pl.program_id(0)

    @pl.when(step == 0)
    def _init():
        out_ref[...] = jnp.zeros_like(out_ref)

    f32 = jnp.float32

    # ---- map_builder, map_method='sum' ----
    # einsum('bld,blv->bdv').sum(dim=1)  ==  sum_l (sum_d dense[b,l,d]) * sparse[b,l,v]
    w = jnp.sum(dense_ref[...].astype(f32), axis=-1)            # (Bt, L)  lane reduce
    sp = sparse_ref[...].astype(f32)                            # (Bt, L, V)
    map_bv = jnp.sum(w[:, :, None] * sp, axis=1)                # (Bt, V)  VPU + small sublane reduce

    # ---- semantic idf target: softmax(idf) * softmax(emb) ----
    idf = idf_ref[...].astype(f32)                              # (1, V)
    e_i = jnp.exp(idf - jnp.max(idf, axis=-1, keepdims=True))
    p_idf = e_i * pl.reciprocal(jnp.sum(e_i, axis=-1, keepdims=True), approx=True)

    emb = emb_ref[...].astype(f32)                              # (Bt, V)
    e_e = jnp.exp(emb - jnp.max(emb, axis=-1, keepdims=True))
    p_emb = e_e * pl.reciprocal(jnp.sum(e_e, axis=-1, keepdims=True), approx=True)

    target = p_idf * p_emb                                      # (Bt, V)

    # ---- KLDivLoss(batchmean)(log_softmax(map), softmax(target)) ----
    # single log_softmax pass for the target, then q = exp(log_q)
    z_t = target - jnp.max(target, axis=-1, keepdims=True)
    log_q = z_t - jnp.log(jnp.sum(jnp.exp(z_t), axis=-1, keepdims=True))
    q = jnp.exp(log_q)

    z_p = map_bv - jnp.max(map_bv, axis=-1, keepdims=True)
    log_p = z_p - jnp.log(jnp.sum(jnp.exp(z_p), axis=-1, keepdims=True))

    kl_part = jnp.sum(q * (log_q - log_p))                      # scalar for this tile
    out_ref[...] = out_ref[...] + jnp.broadcast_to(kl_part, (1, 1))


def _choose_block_b(batch, target=8):
    for bt in (target, 4, 2, 1):
        if batch % bt == 0:
            return bt
    return 1


def branch_kl_sum(dense, sparse, emb, idf_2d):
    """KL( softmax(map_sum(dense,sparse)) || softmax(softmax(idf)*softmax(emb)) ), batchmean."""
    B, L, D = dense.shape
    V = sparse.shape[-1]
    bt = _choose_block_b(B)
    n_tiles = B // bt
    # VMEM per step ~ 2 * (bt*L*V + bt*L*D + bt*V + V) * 4B -- tiny even for large V,
    # so no explicit vmem_limit_bytes is needed (portable incl. v7x 64 MiB).
    kl_sum = pl.pallas_call(
        _branch_kl_kernel,
        out_shape=jax.ShapeDtypeStruct((1, 1), jnp.float32),
        grid=(n_tiles,),
        in_specs=[
            pl.BlockSpec((1, V), lambda i: (0, 0)),           # idf: resident across grid
            pl.BlockSpec((bt, L, D), lambda i: (i, 0, 0)),    # dense tile
            pl.BlockSpec((bt, L, V), lambda i: (i, 0, 0)),    # sparse tile
            pl.BlockSpec((bt, V), lambda i: (i, 0)),          # teacher embeddings tile
        ],
        out_specs=pl.BlockSpec((1, 1), lambda i: (0, 0)),     # resident accumulator
        compiler_params=pltpu.CompilerParams(
            dimension_semantics=("arbitrary",)),               # reduction axis
    )(idf_2d, dense, sparse, emb)
    return kl_sum[0, 0] / B                                    # 'batchmean'


# ---------------------------------------------------------------------------
# Kernel B: margin MSE  (tiny; single un-gridded call)
# ---------------------------------------------------------------------------
def _margin_mse_kernel(pp_ref, pn_ref, lab_ref, out_ref):
    pp = pp_ref[...].astype(jnp.float32)
    pn = pn_ref[...].astype(jnp.float32)
    lab = lab_ref[...].astype(jnp.float32)
    diff = (pp - pn) - lab
    out_ref[...] = jnp.broadcast_to(jnp.mean(diff * diff), (1, 1))


def margin_mse(pred_pos, pred_neg, label, scale=1.0):
    out = pl.pallas_call(
        _margin_mse_kernel,
        out_shape=jax.ShapeDtypeStruct((1, 1), jnp.float32),
    )(pred_pos.reshape(1, -1), pred_neg.reshape(1, -1), label.reshape(1, -1))
    return scale * out[0, 0]


# ---------------------------------------------------------------------------
# Full forward
# ---------------------------------------------------------------------------
@jax.jit
def dense2sparse_semantic_idf_norm_forward(pos_pas_emb, neg_pas_emb,
                                           teacher_pos_pas_emb, teacher_neg_pas_emb,
                                           pos_score_res, neg_score_res, label, idf):
    idf_2d = idf.reshape(1, -1)
    pos_kl = branch_kl_sum(pos_pas_emb["encoded_matrix"],
                           teacher_pos_pas_emb["encoded_logits"],
                           teacher_pos_pas_emb["encoded_embeddings"], idf_2d)
    neg_kl = branch_kl_sum(neg_pas_emb["encoded_matrix"],
                           teacher_neg_pas_emb["encoded_logits"],
                           teacher_neg_pas_emb["encoded_embeddings"], idf_2d)
    student = margin_mse(pos_score_res["relevance"],
                         neg_score_res["relevance"],
                         label["label"], scale=1.0)          # self.scales['margin_mse']
    map_loss = pos_kl + neg_kl
    return {"student_loss": student, "map_loss": map_loss, "loss": student + map_loss}


if __name__ == "__main__":
    B, L, D, V = 16, 8, 32, 256  # batch, seq_len, dense_dim, sparse/vocab dim
    key = jax.random.PRNGKey(0)
    ks = jax.random.split(key, 10)

    pos_dense = jax.random.normal(ks[0], (B, L, D), jnp.float32)
    neg_dense = jax.random.normal(ks[1], (B, L, D), jnp.float32)
    pos_logits = jax.nn.relu(jax.random.normal(ks[2], (B, L, V), jnp.float32))
    neg_logits = jax.nn.relu(jax.random.normal(ks[3], (B, L, V), jnp.float32))
    pos_emb = jax.nn.relu(jax.random.normal(ks[4], (B, V), jnp.float32))
    neg_emb = jax.nn.relu(jax.random.normal(ks[5], (B, V), jnp.float32))
    idf = jax.random.uniform(ks[6], (V,), jnp.float32, 0.0, 8.0)
    pred_pos = jax.random.normal(ks[7], (B,), jnp.float32) + 2.0
    pred_neg = jax.random.normal(ks[8], (B,), jnp.float32)
    label_margin = jax.random.uniform(ks[9], (B,), jnp.float32, 0.0, 2.0)

    losses = dense2sparse_semantic_idf_norm_forward(
        {"encoded_matrix": pos_dense},
        {"encoded_matrix": neg_dense},
        {"encoded_logits": pos_logits, "encoded_embeddings": pos_emb},
        {"encoded_logits": neg_logits, "encoded_embeddings": neg_emb},
        {"relevance": pred_pos},
        {"relevance": pred_neg},
        {"label": label_margin},
        idf,
    )
    losses = jax.block_until_ready(losses)

    # ---- pure-JAX reference (same assumed MarginMSE / KLDiv definitions) ----
    def _ref_kl(dense, sparse, emb, idf_v):
        map_bv = jnp.einsum("bld,bls->bs", dense, sparse)
        target = jax.nn.softmax(idf_v)[None, :] * jax.nn.softmax(emb, axis=-1)
        q = jax.nn.softmax(target, axis=-1)
        log_p = jax.nn.log_softmax(map_bv, axis=-1)
        return jnp.sum(q * (jnp.log(q) - log_p)) / dense.shape[0]

    ref_student = jnp.mean(((pred_pos - pred_neg) - label_margin) ** 2)
    ref_map = (_ref_kl(pos_dense, pos_logits, pos_emb, idf)
               + _ref_kl(neg_dense, neg_logits, neg_emb, idf))
    ref_total = ref_student + ref_map

    assert all(bool(jnp.isfinite(v)) for v in losses.values())
    assert bool(jnp.allclose(losses["student_loss"], ref_student, rtol=2e-2, atol=1e-4))
    assert bool(jnp.allclose(losses["map_loss"], ref_map, rtol=2e-2, atol=1e-4))
    assert bool(jnp.allclose(losses["loss"], ref_total, rtol=2e-2, atol=1e-4))
    print("KERNEL_OK")
</pallas_src>

<mosaic_0001>
module attributes {stable_mosaic.version = 11 : i64} {
  func.func @_margin_mse_kernel(%arg0: memref<1x16xf32, #tpu.memory_space<vmem>>, %arg1: memref<1x16xf32, #tpu.memory_space<vmem>>, %arg2: memref<1x16xf32, #tpu.memory_space<vmem>>, %arg3: memref<1x1xf32, #tpu.memory_space<vmem>>) attributes {dimension_semantics = [], scalar_prefetch = 0 : i64, scratch_operands = 0 : i64, tpu.core_type = #tpu.core_type<tc>} {
    %c0 = arith.constant 0 : index
    %c0_0 = arith.constant 0 : index
    %0 = vector.load %arg0[%c0, %c0_0] : memref<1x16xf32, #tpu.memory_space<vmem>>, vector<1x16xf32>
    %c0_1 = arith.constant 0 : index
    %c0_2 = arith.constant 0 : index
    %1 = vector.load %arg1[%c0_1, %c0_2] : memref<1x16xf32, #tpu.memory_space<vmem>>, vector<1x16xf32>
    %c0_3 = arith.constant 0 : index
    %c0_4 = arith.constant 0 : index
    %2 = vector.load %arg2[%c0_3, %c0_4] : memref<1x16xf32, #tpu.memory_space<vmem>>, vector<1x16xf32>
    %3 = arith.subf %0, %1 : vector<1x16xf32>
    %4 = arith.subf %3, %2 : vector<1x16xf32>
    %5 = arith.mulf %4, %4 : vector<1x16xf32>
    %6 = vector.shape_cast %5 : vector<1x16xf32> to vector<1x1x16xf32>
    %cst = arith.constant dense<0.000000e+00> : vector<1xf32>
    %7 = vector.multi_reduction <add>, %6, %cst [1, 2] : vector<1x1x16xf32> to vector<1xf32>
    %8 = vector.shape_cast %7 : vector<1xf32> to vector<1x1x1xf32>
    %9 = vector.extract %8[0, 0, 0] : f32 from vector<1x1x1xf32>
    %cst_5 = arith.constant 1.600000e+01 : f32
    %10 = arith.divf %9, %cst_5 : f32
    %11 = vector.broadcast %10 : f32 to vector<1x1xf32>
    %c0_6 = arith.constant 0 : index
    %c0_7 = arith.constant 0 : index
    %12 = vector.load %arg3[%c0_6, %c0_7] : memref<1x1xf32, #tpu.memory_space<vmem>>, vector<1x1xf32>
    tpu.vector_store %arg3[%c0_6, %c0_7], %11 {strides = array<i32>} : memref<1x1xf32, #tpu.memory_space<vmem>>, vector<1x1xf32>,
    return
  }
}

module attributes {stable_mosaic.version = 11 : i64} {
  func.func @_branch_kl_kernel(%arg0: i32, %arg1: memref<1x256xf32, #tpu.memory_space<vmem>>, %arg2: memref<8x8x32xf32, #tpu.memory_space<vmem>>, %arg3: memref<8x8x256xf32, #tpu.memory_space<vmem>>, %arg4: memref<8x256xf32, #tpu.memory_space<vmem>>, %arg5: memref<1x1xf32, #tpu.memory_space<vmem>>) attributes {dimension_semantics = [#tpu.dimension_semantics<arbitrary>], iteration_bounds = array<i64: 2>, scalar_prefetch = 0 : i64, scratch_operands = 0 : i64, tpu.core_type = #tpu.core_type<tc>, window_params = [{pipeline_mode = #tpu.pipeline_mode<synchronous>, transform_indices = @transform_0, window_bounds = array<i64: 1, 256>}, {transform_indices = @transform_1, window_bounds = array<i64: 8, 8, 32>}, {transform_indices = @transform_2, window_bounds = array<i64: 8, 8, 256>}, {transform_indices = @transform_3, window_bounds = array<i64: 8, 256>}, {pipeline_mode = #tpu.pipeline_mode<synchronous>, transform_indices = @transform_4, window_bounds = array<i64: 1, 1>}]} {
    %c0_i32 = arith.constant 0 : i32
    %0 = arith.cmpi eq, %arg0, %c0_i32 : i32
    %1 = arith.extui %0 : i1 to i32
    %c0_i32_0 = arith.constant 0 : i32
    %2 = arith.cmpi ne, %1, %c0_i32_0 : i32
    scf.if %2 {
      %cst_24 = arith.constant 0.000000e+00 : f32
      %65 = vector.broadcast %cst_24 : f32 to vector<1x1xf32>
      %c0_25 = arith.constant 0 : index
      %c0_26 = arith.constant 0 : index
      %66 = vector.load %arg5[%c0_25, %c0_26] : memref<1x1xf32, #tpu.memory_space<vmem>>, vector<1x1xf32>
      tpu.vector_store %arg5[%c0_25, %c0_26], %65 {strides = array<i32>} : memref<1x1xf32, #tpu.memory_space<vmem>>, vector<1x1xf32>,
    } else {
    }
    %c0 = arith.constant 0 : index
    %c0_1 = arith.constant 0 : index
    %c0_2 = arith.constant 0 : index
    %3 = vector.load %arg2[%c0, %c0_1, %c0_2] : memref<8x8x32xf32, #tpu.memory_space<vmem>>, vector<8x8x32xf32>
    %cst = arith.constant dense<0.000000e+00> : vector<8x8xf32>
    %4 = vector.multi_reduction <add>, %3, %cst [2] : vector<8x8x32xf32> to vector<8x8xf32>
    %c0_3 = arith.constant 0 : index
    %c0_4 = arith.constant 0 : index
    %c0_5 = arith.constant 0 : index
    %5 = vector.load %arg3[%c0_3, %c0_4, %c0_5] : memref<8x8x256xf32, #tpu.memory_space<vmem>>, vector<8x8x256xf32>
    %6 = vector.shape_cast %4 : vector<8x8xf32> to vector<8x8x1xf32>
    %7 = vector.broadcast %6 : vector<8x8x1xf32> to vector<8x8x256xf32>
    %8 = arith.mulf %7, %5 : vector<8x8x256xf32>
    %cst_6 = arith.constant dense<0.000000e+00> : vector<8x256xf32>
    %9 = vector.multi_reduction <add>, %8, %cst_6 [1] : vector<8x8x256xf32> to vector<8x256xf32>
    %c0_7 = arith.constant 0 : index
    %c0_8 = arith.constant 0 : index
    %10 = vector.load %arg1[%c0_7, %c0_8] : memref<1x256xf32, #tpu.memory_space<vmem>>, vector<1x256xf32>
    %cst_9 = arith.constant dense<0xFF800000> : vector<1xf32>
    %11 = vector.multi_reduction <maximumf>, %10, %cst_9 [1] : vector<1x256xf32> to vector<1xf32>
    %12 = vector.shape_cast %11 : vector<1xf32> to vector<1x1xf32>
    %13 = vector.broadcast %12 : vector<1x1xf32> to vector<1x256xf32>
    %14 = arith.subf %10, %13 : vector<1x256xf32>
    %15 = math.exp %14 : vector<1x256xf32>
    %cst_10 = arith.constant dense<0.000000e+00> : vector<1xf32>
    %16 = vector.multi_reduction <add>, %15, %cst_10 [1] : vector<1x256xf32> to vector<1xf32>
    %17 = vector.shape_cast %16 : vector<1xf32> to vector<1x1xf32>
    %18 = tpu.reciprocal %17 {approx = true} : vector<1x1xf32> -> vector<1x1xf32>
    %19 = vector.broadcast %18 : vector<1x1xf32> to vector<1x256xf32>
    %20 = arith.mulf %15, %19 : vector<1x256xf32>
    %c0_11 = arith.constant 0 : index
    %c0_12 = arith.constant 0 : index
    %21 = vector.load %arg4[%c0_11, %c0_12] : memref<8x256xf32, #tpu.memory_space<vmem>>, vector<8x256xf32>
    %cst_13 = arith.constant dense<0xFF800000> : vector<8xf32>
    %22 = vector.multi_reduction <maximumf>, %21, %cst_13 [1] : vector<8x256xf32> to vector<8xf32>
    %23 = vector.shape_cast %22 : vector<8xf32> to vector<8x1xf32>
    %24 = vector.broadcast %23 : vector<8x1xf32> to vector<8x256xf32>
    %25 = arith.subf %21, %24 : vector<8x256xf32>
    %26 = math.exp %25 : vector<8x256xf32>
    %cst_14 = arith.constant dense<0.000000e+00> : vector<8xf32>
    %27 = vector.multi_reduction <add>, %26, %cst_14 [1] : vector<8x256xf32> to vector<8xf32>
    %28 = vector.shape_cast %27 : vector<8xf32> to vector<8x1xf32>
    %29 = tpu.reciprocal %28 {approx = true} : vector<8x1xf32> -> vector<8x1xf32>
    %30 = vector.broadcast %29 : vector<8x1xf32> to vector<8x256xf32>
    %31 = arith.mulf %26, %30 : vector<8x256xf32>
    %32 = vector.broadcast %20 : vector<1x256xf32> to vector<8x256xf32>
    %33 = arith.mulf %32, %31 : vector<8x256xf32>
    %cst_15 = arith.constant dense<0xFF800000> : vector<8xf32>
    %34 = vector.multi_reduction <maximumf>, %33, %cst_15 [1] : vector<8x256xf32> to vector<8xf32>
    %35 = vector.shape_cast %34 : vector<8xf32> to vector<8x1xf32>
    %36 = vector.broadcast %35 : vector<8x1xf32> to vector<8x256xf32>
    %37 = arith.subf %33, %36 : vector<8x256xf32>
    %38 = math.exp %37 : vector<8x256xf32>
    %cst_16 = arith.constant dense<0.000000e+00> : vector<8xf32>
    %39 = vector.multi_reduction <add>, %38, %cst_16 [1] : vector<8x256xf32> to vector<8xf32>
    %40 = vector.shape_cast %39 : vector<8xf32> to vector<8x1xf32>
    %41 = math.log %40 : vector<8x1xf32>
    %42 = vector.broadcast %41 : vector<8x1xf32> to vector<8x256xf32>
    %43 = arith.subf %37, %42 : vector<8x256xf32>
    %44 = math.exp %43 : vector<8x256xf32>
    %cst_17 = arith.constant dense<0xFF800000> : vector<8xf32>
    %45 = vector.multi_reduction <maximumf>, %9, %cst_17 [1] : vector<8x256xf32> to vector<8xf32>
    %46 = vector.shape_cast %45 : vector<8xf32> to vector<8x1xf32>
    %47 = vector.broadcast %46 : vector<8x1xf32> to vector<8x256xf32>
    %48 = arith.subf %9, %47 : vector<8x256xf32>
    %49 = math.exp %48 : vector<8x256xf32>
    %cst_18 = arith.constant dense<0.000000e+00> : vector<8xf32>
    %50 = vector.multi_reduction <add>, %49, %cst_18 [1] : vector<8x256xf32> to vector<8xf32>
    %51 = vector.shape_cast %50 : vector<8xf32> to vector<8x1xf32>
    %52 = math.log %51 : vector<8x1xf32>
    %53 = vector.broadcast %52 : vector<8x1xf32> to vector<8x256xf32>
    %54 = arith.subf %48, %53 : vector<8x256xf32>
    %55 = arith.subf %43, %54 : vector<8x256xf32>
    %56 = arith.mulf %44, %55 : vector<8x256xf32>
    %57 = vector.shape_cast %56 : vector<8x256xf32> to vector<1x8x256xf32>
    %cst_19 = arith.constant dense<0.000000e+00> : vector<1xf32>
    %58 = vector.multi_reduction <add>, %57, %cst_19 [1, 2] : vector<1x8x256xf32> to vector<1xf32>
    %59 = vector.shape_cast %58 : vector<1xf32> to vector<1x1x1xf32>
    %60 = vector.extract %59[0, 0, 0] : f32 from vector<1x1x1xf32>
    %c0_20 = arith.constant 0 : index
    %c0_21 = arith.constant 0 : index
    %61 = vector.load %arg5[%c0_20, %c0_21] : memref<1x1xf32, #tpu.memory_space<vmem>>, vector<1x1xf32>
    %62 = vector.broadcast %60 : f32 to vector<1x1xf32>
    %63 = arith.addf %61, %62 : vector<1x1xf32>
    %c0_22 = arith.constant 0 : index
    %c0_23 = arith.constant 0 : index
    %64 = vector.load %arg5[%c0_22, %c0_23] : memref<1x1xf32, #tpu.memory_space<vmem>>, vector<1x1xf32>
    tpu.vector_store %arg5[%c0_22, %c0_23], %63 {strides = array<i32>} : memref<1x1xf32, #tpu.memory_space<vmem>>, vector<1x1xf32>,
    return
  }
  func.func @transform_0(%arg0: i32) -> (i32, i32) {
    %c0_i32 = arith.constant 0 : i32
    %c0_i32_0 = arith.constant 0 : i32
    %c0_i32_1 = arith.constant 0 : i32
    return %c0_i32, %c0_i32_0 : i32, i32
  }
  func.func @transform_1(%arg0: i32) -> (i32, i32, i32) {
    %c0_i32 = arith.constant 0 : i32
    %c0_i32_0 = arith.constant 0 : i32
    %c0_i32_1 = arith.constant 0 : i32
    return %arg0, %c0_i32, %c0_i32_0 : i32, i32, i32
  }
  func.func @transform_2(%arg0: i32) -> (i32, i32, i32) {
    %c0_i32 = arith.constant 0 : i32
    %c0_i32_0 = arith.constant 0 : i32
    %c0_i32_1 = arith.constant 0 : i32
    return %arg0, %c0_i32, %c0_i32_0 : i32, i32, i32
  }
  func.func @transform_3(%arg0: i32) -> (i32, i32) {
    %c0_i32 = arith.constant 0 : i32
    %c0_i32_0 = arith.constant 0 : i32
    return %arg0, %c0_i32 : i32, i32
  }
  func.func @transform_4(%arg0: i32) -> (i32, i32) {
    %c0_i32 = arith.constant 0 : i32
    %c0_i32_0 = arith.constant 0 : i32
    %c0_i32_1 = arith.constant 0 : i32
    return %c0_i32, %c0_i32_0 : i32, i32
  }
}

module attributes {stable_mosaic.version = 11 : i64} {
  func.func @_branch_kl_kernel(%arg0: i32, %arg1: memref<1x256xf32, #tpu.memory_space<vmem>>, %arg2: memref<8x8x32xf32, #tpu.memory_space<vmem>>, %arg3: memref<8x8x256xf32, #tpu.memory_space<vmem>>, %arg4: memref<8x256xf32, #tpu.memory_space<vmem>>, %arg5: memref<1x1xf32, #tpu.memory_space<vmem>>) attributes {dimension_semantics = [#tpu.dimension_semantics<arbitrary>], iteration_bounds = array<i64: 2>, scalar_prefetch = 0 : i64, scratch_operands = 0 : i64, tpu.core_type = #tpu.core_type<tc>, window_params = [{pipeline_mode = #tpu.pipeline_mode<synchronous>, transform_indices = @transform_0, window_bounds = array<i64: 1, 256>}, {transform_indices = @transform_1, window_bounds = array<i64: 8, 8, 32>}, {transform_indices = @transform_2, window_bounds = array<i64: 8, 8, 256>}, {transform_indices = @transform_3, window_bounds = array<i64: 8, 256>}, {pipeline_mode = #tpu.pipeline_mode<synchronous>, transform_indices = @transform_4, window_bounds = array<i64: 1, 1>}]} {
    %c0_i32 = arith.constant 0 : i32
    %0 = arith.cmpi eq, %arg0, %c0_i32 : i32
    %1 = arith.extui %0 : i1 to i32
    %c0_i32_0 = arith.constant 0 : i32
    %2 = arith.cmpi ne, %1, %c0_i32_0 : i32
    scf.if %2 {
      %cst_24 = arith.constant 0.000000e+00 : f32
      %65 = vector.broadcast %cst_24 : f32 to vector<1x1xf32>
      %c0_25 = arith.constant 0 : index
      %c0_26 = arith.constant 0 : index
      %66 = vector.load %arg5[%c0_25, %c0_26] : memref<1x1xf32, #tpu.memory_space<vmem>>, vector<1x1xf32>
      tpu.vector_store %arg5[%c0_25, %c0_26], %65 {strides = array<i32>} : memref<1x1xf32, #tpu.memory_space<vmem>>, vector<1x1xf32>,
    } else {
    }
    %c0 = arith.constant 0 : index
    %c0_1 = arith.constant 0 : index
    %c0_2 = arith.constant 0 : index
    %3 = vector.load %arg2[%c0, %c0_1, %c0_2] : memref<8x8x32xf32, #tpu.memory_space<vmem>>, vector<8x8x32xf32>
    %cst = arith.constant dense<0.000000e+00> : vector<8x8xf32>
    %4 = vector.multi_reduction <add>, %3, %cst [2] : vector<8x8x32xf32> to vector<8x8xf32>
    %c0_3 = arith.constant 0 : index
    %c0_4 = arith.constant 0 : index
    %c0_5 = arith.constant 0 : index
    %5 = vector.load %arg3[%c0_3, %c0_4, %c0_5] : memref<8x8x256xf32, #tpu.memory_space<vmem>>, vector<8x8x256xf32>
    %6 = vector.shape_cast %4 : vector<8x8xf32> to vector<8x8x1xf32>
    %7 = vector.broadcast %6 : vector<8x8x1xf32> to vector<8x8x256xf32>
    %8 = arith.mulf %7, %5 : vector<8x8x256xf32>
    %cst_6 = arith.constant dense<0.000000e+00> : vector<8x256xf32>
    %9 = vector.multi_reduction <add>, %8, %cst_6 [1] : vector<8x8x256xf32> to vector<8x256xf32>
    %c0_7 = arith.constant 0 : index
    %c0_8 = arith.constant 0 : index
    %10 = vector.load %arg1[%c0_7, %c0_8] : memref<1x256xf32, #tpu.memory_space<vmem>>, vector<1x256xf32>
    %cst_9 = arith.constant dense<0xFF800000> : vector<1xf32>
    %11 = vector.multi_reduction <maximumf>, %10, %cst_9 [1] : vector<1x256xf32> to vector<1xf32>
    %12 = vector.shape_cast %11 : vector<1xf32> to vector<1x1xf32>
    %13 = vector.broadcast %12 : vector<1x1xf32> to vector<1x256xf32>
    %14 = arith.subf %10, %13 : vector<1x256xf32>
    %15 = math.exp %14 : vector<1x256xf32>
    %cst_10 = arith.constant dense<0.000000e+00> : vector<1xf32>
    %16 = vector.multi_reduction <add>, %15, %cst_10 [1] : vector<1x256xf32> to vector<1xf32>
    %17 = vector.shape_cast %16 : vector<1xf32> to vector<1x1xf32>
    %18 = tpu.reciprocal %17 {approx = true} : vector<1x1xf32> -> vector<1x1xf32>
    %19 = vector.broadcast %18 : vector<1x1xf32> to vector<1x256xf32>
    %20 = arith.mulf %15, %19 : vector<1x256xf32>
    %c0_11 = arith.constant 0 : index
    %c0_12 = arith.constant 0 : index
    %21 = vector.load %arg4[%c0_11, %c0_12] : memref<8x256xf32, #tpu.memory_space<vmem>>, vector<8x256xf32>
    %cst_13 = arith.constant dense<0xFF800000> : vector<8xf32>
    %22 = vector.multi_reduction <maximumf>, %21, %cst_13 [1] : vector<8x256xf32> to vector<8xf32>
    %23 = vector.shape_cast %22 : vector<8xf32> to vector<8x1xf32>
    %24 = vector.broadcast %23 : vector<8x1xf32> to vector<8x256xf32>
    %25 = arith.subf %21, %24 : vector<8x256xf32>
    %26 = math.exp %25 : vector<8x256xf32>
    %cst_14 = arith.constant dense<0.000000e+00> : vector<8xf32>
    %27 = vector.multi_reduction <add>, %26, %cst_14 [1] : vector<8x256xf32> to vector<8xf32>
    %28 = vector.shape_cast %27 : vector<8xf32> to vector<8x1xf32>
    %29 = tpu.reciprocal %28 {approx = true} : vector<8x1xf32> -> vector<8x1xf32>
    %30 = vector.broadcast %29 : vector<8x1xf32> to vector<8x256xf32>
    %31 = arith.mulf %26, %30 : vector<8x256xf32>
    %32 = vector.broadcast %20 : vector<1x256xf32> to vector<8x256xf32>
    %33 = arith.mulf %32, %31 : vector<8x256xf32>
    %cst_15 = arith.constant dense<0xFF800000> : vector<8xf32>
    %34 = vector.multi_reduction <maximumf>, %33, %cst_15 [1] : vector<8x256xf32> to vector<8xf32>
    %35 = vector.shape_cast %34 : vector<8xf32> to vector<8x1xf32>
    %36 = vector.broadcast %35 : vector<8x1xf32> to vector<8x256xf32>
    %37 = arith.subf %33, %36 : vector<8x256xf32>
    %38 = math.exp %37 : vector<8x256xf32>
    %cst_16 = arith.constant dense<0.000000e+00> : vector<8xf32>
    %39 = vector.multi_reduction <add>, %38, %cst_16 [1] : vector<8x256xf32> to vector<8xf32>
    %40 = vector.shape_cast %39 : vector<8xf32> to vector<8x1xf32>
    %41 = math.log %40 : vector<8x1xf32>
    %42 = vector.broadcast %41 : vector<8x1xf32> to vector<8x256xf32>
    %43 = arith.subf %37, %42 : vector<8x256xf32>
    %44 = math.exp %43 : vector<8x256xf32>
    %cst_17 = arith.constant dense<0xFF800000> : vector<8xf32>
    %45 = vector.multi_reduction <maximumf>, %9, %cst_17 [1] : vector<8x256xf32> to vector<8xf32>
    %46 = vector.shape_cast %45 : vector<8xf32> to vector<8x1xf32>
    %47 = vector.broadcast %46 : vector<8x1xf32> to vector<8x256xf32>
    %48 = arith.subf %9, %47 : vector<8x256xf32>
    %49 = math.exp %48 : vector<8x256xf32>
    %cst_18 = arith.constant dense<0.000000e+00> : vector<8xf32>
    %50 = vector.multi_reduction <add>, %49, %cst_18 [1] : vector<8x256xf32> to vector<8xf32>
    %51 = vector.shape_cast %50 : vector<8xf32> to vector<8x1xf32>
    %52 = math.log %51 : vector<8x1xf32>
    %53 = vector.broadcast %52 : vector<8x1xf32> to vector<8x256xf32>
    %54 = arith.subf %48, %53 : vector<8x256xf32>
    %55 = arith.subf %43, %54 : vector<8x256xf32>
    %56 = arith.mulf %44, %55 : vector<8x256xf32>
    %57 = vector.shape_cast %56 : vector<8x256xf32> to vector<1x8x256xf32>
    %cst_19 = arith.constant dense<0.000000e+00> : vector<1xf32>
    %58 = vector.multi_reduction <add>, %57, %cst_19 [1, 2] : vector<1x8x256xf32> to vector<1xf32>
    %59 = vector.shape_cast %58 : vector<1xf32> to vector<1x1x1xf32>
    %60 = vector.extract %59[0, 0, 0] : f32 from vector<1x1x1xf32>
    %c0_20 = arith.constant 0 : index
    %c0_21 = arith.constant 0 : index
    %61 = vector.load %arg5[%c0_20, %c0_21] : memref<1x1xf32, #tpu.memory_space<vmem>>, vector<1x1xf32>
    %62 = vector.broadcast %60 : f32 to vector<1x1xf32>
    %63 = arith.addf %61, %62 : vector<1x1xf32>
    %c0_22 = arith.constant 0 : index
    %c0_23 = arith.constant 0 : index
    %64 = vector.load %arg5[%c0_22, %c0_23] : memref<1x1xf32, #tpu.memory_space<vmem>>, vector<1x1xf32>
    tpu.vector_store %arg5[%c0_22, %c0_23], %63 {strides = array<i32>} : memref<1x1xf32, #tpu.memory_space<vmem>>, vector<1x1xf32>,
    return
  }
  func.func @transform_0(%arg0: i32) -> (i32, i32) {
    %c0_i32 = arith.constant 0 : i32
    %c0_i32_0 = arith.constant 0 : i32
    %c0_i32_1 = arith.constant 0 : i32
    return %c0_i32, %c0_i32_0 : i32, i32
  }
  func.func @transform_1(%arg0: i32) -> (i32, i32, i32) {
    %c0_i32 = arith.constant 0 : i32
    %c0_i32_0 = arith.constant 0 : i32
    %c0_i32_1 = arith.constant 0 : i32
    return %arg0, %c0_i32, %c0_i32_0 : i32, i32, i32
  }
  func.func @transform_2(%arg0: i32) -> (i32, i32, i32) {
    %c0_i32 = arith.constant 0 : i32
    %c0_i32_0 = arith.constant 0 : i32
    %c0_i32_1 = arith.constant 0 : i32
    return %arg0, %c0_i32, %c0_i32_0 : i32, i32, i32
  }
  func.func @transform_3(%arg0: i32) -> (i32, i32) {
    %c0_i32 = arith.constant 0 : i32
    %c0_i32_0 = arith.constant 0 : i32
    return %arg0, %c0_i32 : i32, i32
  }
  func.func @transform_4(%arg0: i32) -> (i32, i32) {
    %c0_i32 = arith.constant 0 : i32
    %c0_i32_0 = arith.constant 0 : i32
    %c0_i32_1 = arith.constant 0 : i32
    return %c0_i32, %c0_i32_0 : i32, i32
  }
}

</mosaic_0001>

<llo_original>
// kernel: dense2sparse_semantic_idf_norm_forward.5
$region0: #{dense2sparse_semantic_idf_norm_forward.5}
  #allocation0 [shape = 'u32[]', space=smem, size = 0x4, offset = 0x4, fixed_abs, tag = 'smem constant byte address 0x4 - core index']
  #allocation1 [shape = 'u32[144,128]{1,0:T(1,128)}', space=vmem, size = 0x12000, scoped, tag = 'internal scratch']
  %s0 = inlined_call_operand.vmem [shape: f32[1,16], index: 0, kind: input, shape index: {}]
  %s1 = inlined_call_operand.vmem [shape: f32[1,16], index: 1, kind: input, shape index: {}]
  %s2 = inlined_call_operand.vmem [shape: f32[1,16], index: 2, kind: input, shape index: {}]
  %s3 = inlined_call_operand.hbm [shape: f32[1,1], index: 3, kind: output, shape index: {}]
  %s4 = sld [smem:[#allocation0]]
  $region22: #{dense2sparse_semantic_idf_norm_forward.5} parent=0
    _
  %s6 = ssub.s32 1, %s4
  %s7 = scalar_select 0, %s6, %s4
  $region1: #{dense2sparse_semantic_idf_norm_forward.5} parent=0
    #allocation2 [shape = 'u8[512]{0}', space=vmem, size = 0x400, scoped, tag = 'output window, operand 0, single buffered']
    #allocation3 [shape = 's32[1]{0}', space=sflag, size = 0x4, scoped, tag = 'scoped memory for dense2sparse_semantic_idf_norm_forward.5']
    %8 = vsyncpa [#allocation3], 0
    // Predicated region
    $region2: #{dense2sparse_semantic_idf_norm_forward.5} parent=1 // pred_check
      _
    $region3: #{dense2sparse_semantic_idf_norm_forward.5} parent=1 // pred_check_branch
      %10 = sbr.rel (0) target = $region5
    $region4: #{dense2sparse_semantic_idf_norm_forward.5} parent=1 // pred_region
      _
    $region5: #{dense2sparse_semantic_idf_norm_forward.5} parent=1 // pred_fallthru
      _
    // Predicated region
    $region6: #{dense2sparse_semantic_idf_norm_forward.5} parent=1 // pred_check
      _
    $region7: #{dense2sparse_semantic_idf_norm_forward.5} parent=1 // pred_check_branch
      %12 = sbr.rel (0) target = $region9
    $region8: #{dense2sparse_semantic_idf_norm_forward.5} parent=1 // pred_region
      _
    $region9: #{dense2sparse_semantic_idf_norm_forward.5} parent=1 // pred_fallthru
      _
    // Predicated region
    $region10: #{dense2sparse_semantic_idf_norm_forward.5} parent=1 // pred_check
      _
    $region11: #{dense2sparse_semantic_idf_norm_forward.5} parent=1 // pred_check_branch
      %14 = sbr.rel (0) target = $region13
    $region12: #{dense2sparse_semantic_idf_norm_forward.5} parent=1 // pred_region
      _
    $region13: #{dense2sparse_semantic_idf_norm_forward.5} parent=1 // pred_fallthru
      _
    %v15 = vld [vmem:[%s0] sm:$0x1]
    %v16 = vld [vmem:[%s1] sm:$0x1]
    %v17 = vld [vmem:[%s2] sm:$0x1]
    %v18 = vsub.f32 %v15, %v16
    %v19 = vsub.f32 %v18, %v17
    %v20 = vmul.f32 %v19, %v19
    %vm21 = vcmask 122880
    %v22 = vsel %vm21, %v20, 0.0
    %23 = vadd.xlane.f32.xlu0 %v22
    %v24 = vpop.xlane.xlu0 %23
    %v25 = vrot.slane %v24, 4
    %v26 = vadd.f32 %v24, %v25
    %v27 = vrot.slane %v26, 2
    %v28 = vadd.f32 %v26, %v27
    %v29 = vrot.slane %v28, 1
    %v30 = vadd.f32 %v28, %v29
    %s31 = vtos %v30
    %v32 = vrcp.pop 16.0
    %s33 = vtos %v32
    %s34 = smul.f32 %s31, %s33
    %v35 = vstv %s34
    %vm36 = vcmask 0
    %37 = vst.msk [vmem:[#allocation2] sm:$0x1] %vm36, %v35
    // Predicated region
    $region14: #{dense2sparse_semantic_idf_norm_forward.5} parent=1 // pred_check
      _
    $region15: #{dense2sparse_semantic_idf_norm_forward.5} parent=1 // pred_check_branch
      %39 = sbr.rel (0) target = $region17
    $region16: #{dense2sparse_semantic_idf_norm_forward.5} parent=1 // pred_region
      %s41 = ssub.s32 16, 16
      %42 = vsyncadd [#allocation3], %s41
      %s44 = sshll.u32 [#allocation2], 4
      %s45 = int_to_ptr.vmem [resolvable:$true] %s44
      %47 = dma.vmem_to_hbm [thread:$0]  %s45, 16, %s3, [#allocation3]
    $region17: #{dense2sparse_semantic_idf_norm_forward.5} parent=1 // pred_fallthru
      _
    // Predicated region
    $region18: #{dense2sparse_semantic_idf_norm_forward.5} parent=1 // pred_check
      _
    $region19: #{dense2sparse_semantic_idf_norm_forward.5} parent=1 // pred_check_branch
      %49 = sbr.rel (0) target = $region21
    $region20: #{dense2sparse_semantic_idf_norm_forward.5} parent=1 // pred_region
      %50 = dma.done [#allocation3], 16
    $region21: #{dense2sparse_semantic_idf_norm_forward.5} parent=1 // pred_fallthru
      _
    %51 = vsyncpa [#allocation3], 1

// kernel: dense2sparse_semantic_idf_norm_forward.3
$region0: #{dense2sparse_semantic_idf_norm_forward.3}
  #allocation0 [shape = 'u32[]', space=smem, size = 0x4, offset = 0x4, fixed_abs, tag = 'smem constant byte address 0x4 - core index']
  #allocation1 [shape = 'u32[144,128]{1,0:T(1,128)}', space=vmem, size = 0x12000, scoped, tag = 'internal scratch']
  %s0 = inlined_call_operand.vmem [shape: f32[1,256], index: 0, kind: input, shape index: {}]
  %s1 = inlined_call_operand.vmem [shape: f32[16,8,32], index: 1, kind: input, shape index: {}]
  %s2 = inlined_call_operand.vmem [shape: f32[16,8,256], index: 2, kind: input, shape index: {}]
  %s3 = inlined_call_operand.vmem [shape: f32[16,256], index: 3, kind: input, shape index: {}]
  %s4 = inlined_call_operand.hbm [shape: f32[1,1], index: 4, kind: output, shape index: {}]
  %s5 = sld [smem:[#allocation0]]
  $region53: #{dense2sparse_semantic_idf_norm_forward.3} parent=0
    _
  %s7 = ssub.s32 1, %s5
  %s8 = scalar_select 0, %s7, %s5
  $region1: #{dense2sparse_semantic_idf_norm_forward.3} parent=0
    #allocation2 [shape = 'u8[512]{0}', space=vmem, size = 0x400, scoped, tag = 'output window, operand 0, single buffered']
    #allocation3 [shape = 's32[2]{0}', space=sflag, size = 0x8, scoped, tag = 'scoped memory for dense2sparse_semantic_idf_norm_forward.3']
    %9 = vsyncpa [#allocation3], 0
    loop: start=0, step=1, limit=4
    $region2: #{dense2sparse_semantic_idf_norm_forward.3} parent=1 // loop_pre_header
      _
    $region3: #{dense2sparse_semantic_idf_norm_forward.3} parent=1 // loop_header
      %s11 = sphi 0, %s15
      %p12 = scmp.ge.s32.totalorder %s11, 4
      %s19 = sphi 0, %s19
      %s21 = sphi 0, %s19
      %s22 = sphi 0, %s21
      %s36 = sphi 0, %s22
      %s42 = sphi 0, %s44
      %s45 = sphi 0, %s42
      %s46 = sphi 0, %s45
      %s62 = sphi 0, %s46
      %s68 = sphi 0, %s70
      %s71 = sphi 0, %s68
      %s72 = sphi 0, %s71
      %s88 = sphi 0, %s72
      %s94 = sphi 0, %s96
      %s97 = sphi 0, %s94
      %s98 = sphi 0, %s97
      %s114 = sphi 0, %s98
      %s118 = sphi 0, %s118
      %s120 = sphi 0, %s118
      %s121 = sphi 0, %s120
      %s135 = sphi 0, %s121
    $region4: #{dense2sparse_semantic_idf_norm_forward.3} parent=1 // loop_header_branch
      %14 = sbr.rel (%p12) target = $region8
    $region5: #{dense2sparse_semantic_idf_norm_forward.3} parent=1 // loop_body
      %s16 = ssub.s32 %s11, 1
      %s17 = ssub.s32 %s11, 2
      %s18 = sadd.s32 %s11, 1
      %s20 = sadd.s32 %s19, 1
      %p23 = scmp.eq.s32.totalorder %s11, 1
      %p24 = scmp.ne.s32.totalorder %s19, %s21
      %p25 = scmp.eq.s32.totalorder %s11, 0
      %p26 = por %p24, %p25
      %p27 = scmp.ne.s32.totalorder %s19, %s21
      %p28 = scmp.eq.s32.totalorder %s16, 1
      %p29 = por %p27, %p28
      %p30 = scmp.ne.s32.totalorder %s21, %s22
      %p31 = scmp.eq.s32.totalorder %s16, 0
      %p32 = por %p30, %p31
      %p33 = scmp.ne.s32.totalorder %s21, %s22
      %p34 = scmp.eq.s32.totalorder %s17, 1
      %p35 = por %p33, %p34
      %p37 = scmp.ne.s32.totalorder %s22, %s36
      %p38 = scmp.eq.s32.totalorder %s17, 0
      %p39 = por %p37, %p38
      %s40 = ssub.s32 %s11, %s18
      %p41 = scmp.eq.s32.totalorder %s40, 0
      %s43 = sadd.s32 %s42, 1
      %s44 = scalar_select %p41, %s42, %s43
      %p47 = pneg %p41
      %p48 = scmp.eq.s32.totalorder %s11, 1
      %p49 = por %p47, %p48
      %p50 = scmp.ne.s32.totalorder %s42, %s45
      %p51 = scmp.eq.s32.totalorder %s11, 0
      %p52 = por %p50, %p51
      %p53 = scmp.ne.s32.totalorder %s42, %s45
      %p54 = scmp.eq.s32.totalorder %s16, 1
      %p55 = por %p53, %p54
      %p56 = scmp.ne.s32.totalorder %s45, %s46
      %p57 = scmp.eq.s32.totalorder %s16, 0
      %p58 = por %p56, %p57
      %p59 = scmp.ne.s32.totalorder %s45, %s46
      %p60 = scmp.eq.s32.totalorder %s17, 1
      %p61 = por %p59, %p60
      %p63 = scmp.ne.s32.totalorder %s46, %s62
      %p64 = scmp.eq.s32.totalorder %s17, 0
      %p65 = por %p63, %p64
      %s66 = ssub.s32 %s11, %s18
      %p67 = scmp.eq.s32.totalorder %s66, 0
      %s69 = sadd.s32 %s68, 1
      %s70 = scalar_select %p67, %s68, %s69
      %p73 = pneg %p67
      %p74 = scmp.eq.s32.totalorder %s11, 1
      %p75 = por %p73, %p74
      %p76 = scmp.ne.s32.totalorder %s68, %s71
      %p77 = scmp.eq.s32.totalorder %s11, 0
      %p78 = por %p76, %p77
      %p79 = scmp.ne.s32.totalorder %s68, %s71
      %p80 = scmp.eq.s32.totalorder %s16, 1
      %p81 = por %p79, %p80
      %p82 = scmp.ne.s32.totalorder %s71, %s72
      %p83 = scmp.eq.s32.totalorder %s16, 0
      %p84 = por %p82, %p83
      %p85 = scmp.ne.s32.totalorder %s71, %s72
      %p86 = scmp.eq.s32.totalorder %s17, 1
      %p87 = por %p85, %p86
      %p89 = scmp.ne.s32.totalorder %s72, %s88
      %p90 = scmp.eq.s32.totalorder %s17, 0
      %p91 = por %p89, %p90
      %s92 = ssub.s32 %s11, %s18
      %p93 = scmp.eq.s32.totalorder %s92, 0
      %s95 = sadd.s32 %s94, 1
      %s96 = scalar_select %p93, %s94, %s95
      %p99 = pneg %p93
      %p100 = scmp.eq.s32.totalorder %s11, 1
      %p101 = por %p99, %p100
      %p102 = scmp.ne.s32.totalorder %s94, %s97
      %p103 = scmp.eq.s32.totalorder %s11, 0
      %p104 = por %p102, %p103
      %p105 = scmp.ne.s32.totalorder %s94, %s97
      %p106 = scmp.eq.s32.totalorder %s16, 1
      %p107 = por %p105, %p106
      %p108 = scmp.ne.s32.totalorder %s97, %s98
      %p109 = scmp.eq.s32.totalorder %s16, 0
      %p110 = por %p108, %p109
      %p111 = scmp.ne.s32.totalorder %s97, %s98
      %p112 = scmp.eq.s32.totalorder %s17, 1
      %p113 = por %p111, %p112
      %p115 = scmp.ne.s32.totalorder %s98, %s114
      %p116 = scmp.eq.s32.totalorder %s17, 0
      %p117 = por %p115, %p116
      %s119 = sadd.s32 %s118, 1
      %p122 = scmp.eq.s32.totalorder %s11, 1
      %p123 = scmp.ne.s32.totalorder %s118, %s120
      %p124 = scmp.eq.s32.totalorder %s11, 0
      %p125 = por %p123, %p124
      %p126 = scmp.ne.s32.totalorder %s118, %s120
      %p127 = scmp.eq.s32.totalorder %s16, 1
      %p128 = por %p126, %p127
      %p129 = scmp.ne.s32.totalorder %s120, %s121
      %p130 = scmp.eq.s32.totalorder %s16, 0
      %p131 = por %p129, %p130
      %p132 = scmp.ne.s32.totalorder %s120, %s121
      %p133 = scmp.eq.s32.totalorder %s17, 1
      %p134 = por %p132, %p133
      %p136 = scmp.ne.s32.totalorder %s121, %s135
      %p137 = scmp.eq.s32.totalorder %s17, 0
      %p138 = por %p136, %p137
      %p139 = scmp.le.s32.totalorder 1, %s11
      %p140 = scmp.lt.s32.totalorder %s11, 3
      %p141 = pnand %p139, %p140
      %p142 = pneg %p141
      // Predicated region
      $region9: #{dense2sparse_semantic_idf_norm_forward.3} parent=5 // pred_check
        _
      $region10: #{dense2sparse_semantic_idf_norm_forward.3} parent=5 // pred_check_branch
        %144 = sbr.rel (%p141) target = $region12
      $region11: #{dense2sparse_semantic_idf_norm_forward.3} parent=5 // pred_region
        %s145 = ssub.s32 %s11, 1
        // Predicated region
        $region13: #{dense2sparse_semantic_idf_norm_forward.3} parent=11 // pred_check
          %p146 = pneg %p32
        $region14: #{dense2sparse_semantic_idf_norm_forward.3} parent=11 // pred_check_branch
          %148 = sbr.rel (%p146) target = $region16
        $region15: #{dense2sparse_semantic_idf_norm_forward.3} parent=11 // pred_region
          _
        $region16: #{dense2sparse_semantic_idf_norm_forward.3} parent=11 // pred_fallthru
          _
      $region12: #{dense2sparse_semantic_idf_norm_forward.3} parent=5 // pred_fallthru
        _
      %p149 = scmp.lt.s32.totalorder %s11, 2
      // Predicated region
      $region17: #{dense2sparse_semantic_idf_norm_forward.3} parent=5 // pred_check
        %p150 = pneg %p149
      $region18: #{dense2sparse_semantic_idf_norm_forward.3} parent=5 // pred_check_branch
        %152 = sbr.rel (%p150) target = $region20
      $region19: #{dense2sparse_semantic_idf_norm_forward.3} parent=5 // pred_region
        // Predicated region
        $region21: #{dense2sparse_semantic_idf_norm_forward.3} parent=19 // pred_check
          %p153 = pneg %p52
        $region22: #{dense2sparse_semantic_idf_norm_forward.3} parent=19 // pred_check_branch
          %155 = sbr.rel (%p153) target = $region24
        $region23: #{dense2sparse_semantic_idf_norm_forward.3} parent=19 // pred_region
          %s156 = smul.u32 8, %s11
          %p157 = scmp.lt.s32.totalorder %s156, 15
          %s158 = scalar_select %p157, %s156, 15
          %s159 = smul.addr %s158, 8
          %s160 = scalar_lea.vmem %s1, %s159
          %s161 = smul.u32 8, %s11
        $region24: #{dense2sparse_semantic_idf_norm_forward.3} parent=19 // pred_fallthru
          _
        // Predicated region
        $region25: #{dense2sparse_semantic_idf_norm_forward.3} parent=19 // pred_check
          %p162 = pneg %p78
        $region26: #{dense2sparse_semantic_idf_norm_forward.3} parent=19 // pred_check_branch
          %164 = sbr.rel (%p162) target = $region28
        $region27: #{dense2sparse_semantic_idf_norm_forward.3} parent=19 // pred_region
          %s165 = smul.u32 8, %s11
          %p166 = scmp.lt.s32.totalorder %s165, 15
          %s167 = scalar_select %p166, %s165, 15
          %s168 = smul.addr %s167, 2
          %s169 = smul.addr %s168, 8
          %s170 = scalar_lea.vmem %s2, %s169
          %s171 = smul.u32 8, %s11
        $region28: #{dense2sparse_semantic_idf_norm_forward.3} parent=19 // pred_fallthru
          _
        // Predicated region
        $region29: #{dense2sparse_semantic_idf_norm_forward.3} parent=19 // pred_check
          %p172 = pneg %p104
        $region30: #{dense2sparse_semantic_idf_norm_forward.3} parent=19 // pred_check_branch
          %174 = sbr.rel (%p172) target = $region32
        $region31: #{dense2sparse_semantic_idf_norm_forward.3} parent=19 // pred_region
          %p175 = scmp.lt.s32.totalorder %s11, 1
          %s176 = scalar_select %p175, %s11, 1
          %s177 = smul.addr %s176, 2
          %s178 = smul.addr %s177, 8
          %s179 = scalar_lea.vmem %s3, %s178
        $region32: #{dense2sparse_semantic_idf_norm_forward.3} parent=19 // pred_fallthru
          _
      $region20: #{dense2sparse_semantic_idf_norm_forward.3} parent=5 // pred_fallthru
        _
      %p180 = scmp.le.s32.totalorder 1, %s11
      %p181 = scmp.lt.s32.totalorder %s11, 3
      %p182 = pnand %p180, %p181
      %p183 = pneg %p182
      // Predicated region
      $region33: #{dense2sparse_semantic_idf_norm_forward.3} parent=5 // pred_check
        _
      $region34: #{dense2sparse_semantic_idf_norm_forward.3} parent=5 // pred_check_branch
        %185 = sbr.rel (%p182) target = $region36
      $region35: #{dense2sparse_semantic_idf_norm_forward.3} parent=5 // pred_region
        %s186 = ssub.s32 %s11, 1
        %p187 = pneg %p32
        %p188 = pneg %p29
        %s189 = smul.u32 8, %s16
        %p190 = scmp.lt.s32.totalorder %s189, 15
        %s191 = scalar_select %p190, %s189, 15
        %s192 = smul.addr %s191, 8
        %s193 = scalar_lea.vmem %s1, %s192
        %p194 = pneg %p58
        %p195 = pneg %p55
        %s196 = smul.u32 8, %s16
        %p197 = scmp.lt.s32.totalorder %s196, 15
        %s198 = scalar_select %p197, %s196, 15
        %s199 = smul.addr %s198, 2
        %s200 = smul.addr %s199, 8
        %s201 = scalar_lea.vmem %s2, %s200
        %p202 = pneg %p84
        %p203 = pneg %p81
        %p204 = scmp.lt.s32.totalorder %s16, 1
        %s205 = scalar_select %p204, %s16, 1
        %s206 = smul.addr %s205, 2
        %s207 = smul.addr %s206, 8
        %s208 = scalar_lea.vmem %s3, %s207
        %p209 = pneg %p110
        %p210 = pneg %p107
        %p211 = pneg %p131
        %p212 = pneg %p128
        %s213 = smul.u32 8, %s16
        %p214 = scmp.lt.s32.totalorder %s213, 15
        %s215 = scalar_select %p214, %s213, 15
        %s216 = smul.addr %s215, 8
        %s217 = scalar_lea.vmem %s1, %s216
        %s218 = smul.u32 8, %s16
        %s219 = smul.u32 8, %s16
        %p220 = scmp.lt.s32.totalorder %s219, 15
        %s221 = scalar_select %p220, %s219, 15
        %s222 = smul.addr %s221, 2
        %s223 = smul.addr %s222, 8
        %s224 = scalar_lea.vmem %s2, %s223
        %s225 = smul.u32 8, %s16
        %p226 = scmp.lt.s32.totalorder %s16, 1
        %s227 = scalar_select %p226, %s16, 1
        %s228 = smul.addr %s227, 2
        %s229 = smul.addr %s228, 8
        %s230 = scalar_lea.vmem %s3, %s229
        %p231 = scmp.eq.s32.totalorder %s16, 0
        // Predicated region
        $region37: #{dense2sparse_semantic_idf_norm_forward.3} parent=35 // pred_check
          %p232 = pneg %p231
        $region38: #{dense2sparse_semantic_idf_norm_forward.3} parent=35 // pred_check_branch
          %234 = sbr.rel (%p232) target = $region40
        $region39: #{dense2sparse_semantic_idf_norm_forward.3} parent=35 // pred_region
          %vm235 = vcmask 0
          %236 = vst.msk [vmem:[#allocation2] sm:$0x1] %vm235, 0.0
        $region40: #{dense2sparse_semantic_idf_norm_forward.3} parent=35 // pred_fallthru
          _
        %v237 = vld [vmem:[%s217] sm:$0xff]
        %v238 = vld [vmem:[%s217 + $0x8] sm:$0xff]
        %v239 = vld [vmem:[%s217 + $0x10] sm:$0xff]
        %v240 = vld [vmem:[%s217 + $0x18] sm:$0xff]
        %v241 = vld [vmem:[%s217 + $0x20] sm:$0xff]
        %v242 = vld [vmem:[%s217 + $0x28] sm:$0xff]
        %v243 = vld [vmem:[%s217 + $0x30] sm:$0xff]
        %v244 = vld [vmem:[%s217 + $0x38] sm:$0xff]
        %vm245 = vcmask 261120
        %v246 = vsel %vm245, %v237, 0.0
        %247 = vadd.xlane.f32.xlu0 %v246
        %v248 = vpop.xlane.xlu0 %247
        %v249 = vsel %vm245, %v238, 0.0
        %250 = vadd.xlane.f32.xlu0 %v249
        %v251 = vpop.xlane.xlu0 %250
        %v252 = vsel %vm245, %v239, 0.0
        %253 = vadd.xlane.f32.xlu0 %v252
        %v254 = vpop.xlane.xlu0 %253
        %v255 = vsel %vm245, %v240, 0.0
        %256 = vadd.xlane.f32.xlu0 %v255
        %v257 = vpop.xlane.xlu0 %256
        %v258 = vsel %vm245, %v241, 0.0
        %259 = vadd.xlane.f32.xlu0 %v258
        %v260 = vpop.xlane.xlu0 %259
        %v261 = vsel %vm245, %v242, 0.0
        %262 = vadd.xlane.f32.xlu0 %v261
        %v263 = vpop.xlane.xlu0 %262
        %v264 = vsel %vm245, %v243, 0.0
        %265 = vadd.xlane.f32.xlu0 %v264
        %v266 = vpop.xlane.xlu0 %265
        %v267 = vsel %vm245, %v244, 0.0
        %268 = vadd.xlane.f32.xlu0 %v267
        %v269 = vpop.xlane.xlu0 %268
        %v270 = vld [vmem:[%s224] sm:$0xff]
        %v271 = vld [vmem:[%s224 + $0x8] sm:$0xff]
        %v272 = vld [vmem:[%s224 + $0x10] sm:$0xff]
        %v273 = vld [vmem:[%s224 + $0x18] sm:$0xff]
        %v274 = vld [vmem:[%s224 + $0x20] sm:$0xff]
        %v275 = vld [vmem:[%s224 + $0x28] sm:$0xff]
        %v276 = vld [vmem:[%s224 + $0x30] sm:$0xff]
        %v277 = vld [vmem:[%s224 + $0x38] sm:$0xff]
        %v278 = vld [vmem:[%s224 + $0x40] sm:$0xff]
        %v279 = vld [vmem:[%s224 + $0x48] sm:$0xff]
        %v280 = vld [vmem:[%s224 + $0x50] sm:$0xff]
        %v281 = vld [vmem:[%s224 + $0x58] sm:$0xff]
        %v282 = vld [vmem:[%s224 + $0x60] sm:$0xff]
        %v283 = vld [vmem:[%s224 + $0x68] sm:$0xff]
        %v284 = vld [vmem:[%s224 + $0x70] sm:$0xff]
        %v285 = vld [vmem:[%s224 + $0x78] sm:$0xff]
        %v286 = vmul.f32 %v248, %v270
        %v287 = vmul.f32 %v248, %v271
        %v288 = vmul.f32 %v251, %v272
        %v289 = vmul.f32 %v251, %v273
        %v290 = vmul.f32 %v254, %v274
        %v291 = vmul.f32 %v254, %v275
        %v292 = vmul.f32 %v257, %v276
        %v293 = vmul.f32 %v257, %v277
        %v294 = vmul.f32 %v260, %v278
        %v295 = vmul.f32 %v260, %v279
        %v296 = vmul.f32 %v263, %v280
        %v297 = vmul.f32 %v263, %v281
        %v298 = vmul.f32 %v266, %v282
        %v299 = vmul.f32 %v266, %v283
        %v300 = vmul.f32 %v269, %v284
        %v301 = vmul.f32 %v269, %v285
        %v302 = vrot.slane %v286, 4
        %v303 = vadd.f32 %v286, %v302
        %v304 = vrot.slane %v303, 2
        %v305 = vadd.f32 %v303, %v304
        %v306 = vrot.slane %v305, 1
        %v307 = vadd.f32 %v305, %v306
        %v308 = vrot.slane %v287, 4
        %v309 = vadd.f32 %v287, %v308
        %v310 = vrot.slane %v309, 2
        %v311 = vadd.f32 %v309, %v310
        %v312 = vrot.slane %v311, 1
        %v313 = vadd.f32 %v311, %v312
        %v314 = vrot.slane %v288, 4
        %v315 = vadd.f32 %v288, %v314
        %v316 = vrot.slane %v315, 2
        %v317 = vadd.f32 %v315, %v316
        %v318 = vrot.slane %v317, 1
        %v319 = vadd.f32 %v317, %v318
        %v320 = vrot.slane %v289, 4
        %v321 = vadd.f32 %v289, %v320
        %v322 = vrot.slane %v321, 2
        %v323 = vadd.f32 %v321, %v322
        %v324 = vrot.slane %v323, 1
        %v325 = vadd.f32 %v323, %v324
        %v326 = vrot.slane %v290, 4
        %v327 = vadd.f32 %v290, %v326
        %v328 = vrot.slane %v327, 2
        %v329 = vadd.f32 %v327, %v328
        %v330 = vrot.slane %v329, 1
        %v331 = vadd.f32 %v329, %v330
        %v332 = vrot.slane %v291, 4
        %v333 = vadd.f32 %v291, %v332
        %v334 = vrot.slane %v333, 2
        %v335 = vadd.f32 %v333, %v334
        %v336 = vrot.slane %v335, 1
        %v337 = vadd.f32 %v335, %v336
        %v338 = vrot.slane %v292, 4
        %v339 = vadd.f32 %v292, %v338
        %v340 = vrot.slane %v339, 2
        %v341 = vadd.f32 %v339, %v340
        %v342 = vrot.slane %v341, 1
        %v343 = vadd.f32 %v341, %v342
        %v344 = vrot.slane %v293, 4
        %v345 = vadd.f32 %v293, %v344
        %v346 = vrot.slane %v345, 2
        %v347 = vadd.f32 %v345, %v346
        %v348 = vrot.slane %v347, 1
        %v349 = vadd.f32 %v347, %v348
        %v350 = vrot.slane %v294, 4
        %v351 = vadd.f32 %v294, %v350
        %v352 = vrot.slane %v351, 2
        %v353 = vadd.f32 %v351, %v352
        %v354 = vrot.slane %v353, 1
        %v355 = vadd.f32 %v353, %v354
        %v356 = vrot.slane %v295, 4
        %v357 = vadd.f32 %v295, %v356
        %v358 = vrot.slane %v357, 2
        %v359 = vadd.f32 %v357, %v358
        %v360 = vrot.slane %v359, 1
        %v361 = vadd.f32 %v359, %v360
        %v362 = vrot.slane %v296, 4
        %v363 = vadd.f32 %v296, %v362
        %v364 = vrot.slane %v363, 2
        %v365 = vadd.f32 %v363, %v364
        %v366 = vrot.slane %v365, 1
        %v367 = vadd.f32 %v365, %v366
        %v368 = vrot.slane %v297, 4
        %v369 = vadd.f32 %v297, %v368
        %v370 = vrot.slane %v369, 2
        %v371 = vadd.f32 %v369, %v370
        %v372 = vrot.slane %v371, 1
        %v373 = vadd.f32 %v371, %v372
        %v374 = vrot.slane %v298, 4
        %v375 = vadd.f32 %v298, %v374
        %v376 = vrot.slane %v375, 2
        %v377 = vadd.f32 %v375, %v376
        %v378 = vrot.slane %v377, 1
        %v379 = vadd.f32 %v377, %v378
        %v380 = vrot.slane %v299, 4
        %v381 = vadd.f32 %v299, %v380
        %v382 = vrot.slane %v381, 2
        %v383 = vadd.f32 %v381, %v382
        %v384 = vrot.slane %v383, 1
        %v385 = vadd.f32 %v383, %v384
        %v386 = vrot.slane %v300, 4
        %v387 = vadd.f32 %v300, %v386
        %v388 = vrot.slane %v387, 2
        %v389 = vadd.f32 %v387, %v388
        %v390 = vrot.slane %v389, 1
        %v391 = vadd.f32 %v389, %v390
        %v392 = vrot.slane %v301, 4
        %v393 = vadd.f32 %v301, %v392
        %v394 = vrot.slane %v393, 2
        %v395 = vadd.f32 %v393, %v394
        %v396 = vrot.slane %v395, 1
        %v397 = vadd.f32 %v395, %v396
        %v398 = vld [vmem:[%s0] sm:$0x3]
        %v400 = vlaneseq
        %v401 = vshrl.u32 %v400, 7
        %v402 = vsub.s32 0, %v401
        %v403 = vrot.slane %v398, %v402
        %v404 = vlaneseq
        %v405 = vshrl.u32 %v404, 7
        %v406 = vsub.s32 1, %v405
        %v407 = vrot.slane %v398, %v406
        %vm410 = vcmask 1040384
        %v411 = vsel %vm410, %v403, -inf
        %v412 = vsel %vm410, %v407, -inf
        %v413 = vmax.f32 %v411, %v412
        %414 = vmax.xlane.f32.xlu0 %v413
        %v415 = vpop.xlane.xlu0 %414
        %v417 = vlaneseq
        %v418 = vshrl.u32 %v417, 7
        %v419 = vsub.s32 0, %v418
        %v420 = vrot.slane %v415, %v419
        %v422 = vsub.f32 %v398, %v420
        %v423 = vmul.f32 %v422, 1.442695
        %v424 = vpow.pop %v423
        %v426 = vlaneseq
        %v427 = vshrl.u32 %v426, 7
        %v428 = vsub.s32 0, %v427
        %v429 = vrot.slane %v424, %v428
        %v430 = vlaneseq
        %v431 = vshrl.u32 %v430, 7
        %v432 = vsub.s32 1, %v431
        %v433 = vrot.slane %v424, %v432
        %v436 = vsel %vm410, %v429, 0.0
        %v437 = vsel %vm410, %v433, 0.0
        %v438 = vadd.f32 %v436, %v437
        %439 = vadd.xlane.f32.xlu0 %v438
        %v440 = vpop.xlane.xlu0 %439
        %v441 = vrcp.pop %v440
        %v443 = vlaneseq
        %v444 = vshrl.u32 %v443, 7
        %v445 = vsub.s32 0, %v444
        %v446 = vrot.slane %v441, %v445
        %v448 = vmul.f32 %v424, %v446
        %v449 = vld [vmem:[%s230] sm:$0xff]
        %v450 = vld [vmem:[%s230 + $0x8] sm:$0xff]
        %v451 = vmax.f32 %v449, %v450
        %452 = vmax.xlane.f32.xlu0 %v451
        %v453 = vpop.xlane.xlu0 %452
        %v454 = vsub.f32 %v449, %v453
        %v455 = vsub.f32 %v450, %v453
        %v456 = vmul.f32 %v454, 1.442695
        %v457 = vpow.pop %v456
        %v458 = vmul.f32 %v455, 1.442695
        %v459 = vpow.pop %v458
        %v460 = vadd.f32 %v457, %v459
        %461 = vadd.xlane.f32.xlu0 %v460
        %v462 = vpop.xlane.xlu0 %461
        %v463 = vrcp.pop %v462
        %v464 = vmul.f32 %v457, %v463
        %v465 = vmul.f32 %v459, %v463
        %v467 = vlaneseq
        %v468 = vshrl.u32 %v467, 7
        %v469 = vsub.s32 0, %v468
        %v470 = vrot.slane %v448, %v469
        %v471 = vlaneseq
        %v472 = vshrl.u32 %v471, 7
        %v473 = vsub.s32 1, %v472
        %v474 = vrot.slane %v448, %v473
        %v477 = vmul.f32 %v470, %v464
        %v478 = vmul.f32 %v474, %v465
        %v479 = vmax.f32 %v477, %v478
        %480 = vmax.xlane.f32.xlu0 %v479
        %v481 = vpop.xlane.xlu0 %480
        %v482 = vsub.f32 %v477, %v481
        %v483 = vsub.f32 %v478, %v481
        %v484 = vmul.f32 %v482, 1.442695
        %v485 = vpow.pop %v484
        %v486 = vmul.f32 %v483, 1.442695
        %v487 = vpow.pop %v486
        %v488 = vadd.f32 %v485, %v487
        %489 = vadd.xlane.f32.xlu0 %v488
        %v490 = vpop.xlane.xlu0 %489
        %v491 = vlog2.pop %v490
        %v492 = vmul.f32 %v491, 0.6931472
        %v493 = vsub.f32 %v482, %v492
        %v494 = vsub.f32 %v483, %v492
        %v495 = vmul.f32 %v493, 1.442695
        %v496 = vpow.pop %v495
        %v497 = vmul.f32 %v494, 1.442695
        %v498 = vpow.pop %v497
        %vm515 = vcmask 1041409
        %v516 = vsel %vm515, %v319, %v307
        %vm517 = vcmask 1042434
        %v518 = vsel %vm517, %v331, %v516
        %vm519 = vcmask 1043459
        %v520 = vsel %vm519, %v343, %v518
        %vm521 = vcmask 1044484
        %v522 = vsel %vm521, %v355, %v520
        %vm523 = vcmask 1045509
        %v524 = vsel %vm523, %v367, %v522
        %vm525 = vcmask 1046534
        %v526 = vsel %vm525, %v379, %v524
        %vm527 = vcmask 1047559
        %v528 = vsel %vm527, %v391, %v526
        %v529 = vsel %vm515, %v325, %v313
        %v530 = vsel %vm517, %v337, %v529
        %v531 = vsel %vm519, %v349, %v530
        %v532 = vsel %vm521, %v361, %v531
        %v533 = vsel %vm523, %v373, %v532
        %v534 = vsel %vm525, %v385, %v533
        %v535 = vsel %vm527, %v397, %v534
        %v538 = vmax.f32 %v528, %v535
        %539 = vmax.xlane.f32.xlu0 %v538
        %v540 = vpop.xlane.xlu0 %539
        %v542 = vrot.slane %v540, 1
        %v543 = vrot.slane %v540, 2
        %v544 = vrot.slane %v540, 3
        %v545 = vrot.slane %v540, 4
        %v546 = vrot.slane %v540, 5
        %v547 = vrot.slane %v540, 6
        %v548 = vrot.slane %v540, 7
        %v557 = vsub.f32 %v307, %v540
        %v558 = vsub.f32 %v313, %v540
        %v559 = vsub.f32 %v319, %v542
        %v560 = vsub.f32 %v325, %v542
        %v561 = vsub.f32 %v331, %v543
        %v562 = vsub.f32 %v337, %v543
        %v563 = vsub.f32 %v343, %v544
        %v564 = vsub.f32 %v349, %v544
        %v565 = vsub.f32 %v355, %v545
        %v566 = vsub.f32 %v361, %v545
        %v567 = vsub.f32 %v367, %v546
        %v568 = vsub.f32 %v373, %v546
        %v569 = vsub.f32 %v379, %v547
        %v570 = vsub.f32 %v385, %v547
        %v571 = vsub.f32 %v391, %v548
        %v572 = vsub.f32 %v397, %v548
        %v573 = vmul.f32 %v557, 1.442695
        %v574 = vpow.pop %v573
        %v575 = vmul.f32 %v558, 1.442695
        %v576 = vpow.pop %v575
        %v577 = vmul.f32 %v559, 1.442695
        %v578 = vpow.pop %v577
        %v579 = vmul.f32 %v560, 1.442695
        %v580 = vpow.pop %v579
        %v581 = vmul.f32 %v561, 1.442695
        %v582 = vpow.pop %v581
        %v583 = vmul.f32 %v562, 1.442695
        %v584 = vpow.pop %v583
        %v585 = vmul.f32 %v563, 1.442695
        %v586 = vpow.pop %v585
        %v587 = vmul.f32 %v564, 1.442695
        %v588 = vpow.pop %v587
        %v589 = vmul.f32 %v565, 1.442695
        %v590 = vpow.pop %v589
        %v591 = vmul.f32 %v566, 1.442695
        %v592 = vpow.pop %v591
        %v593 = vmul.f32 %v567, 1.442695
        %v594 = vpow.pop %v593
        %v595 = vmul.f32 %v568, 1.442695
        %v596 = vpow.pop %v595
        %v597 = vmul.f32 %v569, 1.442695
        %v598 = vpow.pop %v597
        %v599 = vmul.f32 %v570, 1.442695
        %v600 = vpow.pop %v599
        %v601 = vmul.f32 %v571, 1.442695
        %v602 = vpow.pop %v601
        %v603 = vmul.f32 %v572, 1.442695
        %v604 = vpow.pop %v603
        %v621 = vrot.slane %v578, 7
        %v622 = vsel %vm515, %v621, %v574
        %v623 = vrot.slane %v582, 6
        %v624 = vsel %vm517, %v623, %v622
        %v625 = vrot.slane %v586, 5
        %v626 = vsel %vm519, %v625, %v624
        %v627 = vrot.slane %v590, 4
        %v628 = vsel %vm521, %v627, %v626
        %v629 = vrot.slane %v594, 3
        %v630 = vsel %vm523, %v629, %v628
        %v631 = vrot.slane %v598, 2
        %v632 = vsel %vm525, %v631, %v630
        %v633 = vrot.slane %v602, 1
        %v634 = vsel %vm527, %v633, %v632
        %v635 = vrot.slane %v580, 7
        %v636 = vsel %vm515, %v635, %v576
        %v637 = vrot.slane %v584, 6
        %v638 = vsel %vm517, %v637, %v636
        %v639 = vrot.slane %v588, 5
        %v640 = vsel %vm519, %v639, %v638
        %v641 = vrot.slane %v592, 4
        %v642 = vsel %vm521, %v641, %v640
        %v643 = vrot.slane %v596, 3
        %v644 = vsel %vm523, %v643, %v642
        %v645 = vrot.slane %v600, 2
        %v646 = vsel %vm525, %v645, %v644
        %v647 = vrot.slane %v604, 1
        %v648 = vsel %vm527, %v647, %v646
        %v651 = vadd.f32 %v634, %v648
        %652 = vadd.xlane.f32.xlu0 %v651
        %v653 = vpop.xlane.xlu0 %652
        %v654 = vlog2.pop %v653
        %v655 = vmul.f32 %v654, 0.6931472
        %v657 = vrot.slane %v655, 1
        %v658 = vrot.slane %v655, 2
        %v659 = vrot.slane %v655, 3
        %v660 = vrot.slane %v655, 4
        %v661 = vrot.slane %v655, 5
        %v662 = vrot.slane %v655, 6
        %v663 = vrot.slane %v655, 7
        %v672 = vsub.f32 %v557, %v655
        %v673 = vsub.f32 %v558, %v655
        %v674 = vsub.f32 %v559, %v657
        %v675 = vsub.f32 %v560, %v657
        %v676 = vsub.f32 %v561, %v658
        %v677 = vsub.f32 %v562, %v658
        %v678 = vsub.f32 %v563, %v659
        %v679 = vsub.f32 %v564, %v659
        %v680 = vsub.f32 %v565, %v660
        %v681 = vsub.f32 %v566, %v660
        %v682 = vsub.f32 %v567, %v661
        %v683 = vsub.f32 %v568, %v661
        %v684 = vsub.f32 %v569, %v662
        %v685 = vsub.f32 %v570, %v662
        %v686 = vsub.f32 %v571, %v663
        %v687 = vsub.f32 %v572, %v663
        %v704 = vrot.slane %v674, 7
        %v705 = vsel %vm515, %v704, %v672
        %v706 = vrot.slane %v676, 6
        %v707 = vsel %vm517, %v706, %v705
        %v708 = vrot.slane %v678, 5
        %v709 = vsel %vm519, %v708, %v707
        %v710 = vrot.slane %v680, 4
        %v711 = vsel %vm521, %v710, %v709
        %v712 = vrot.slane %v682, 3
        %v713 = vsel %vm523, %v712, %v711
        %v714 = vrot.slane %v684, 2
        %v715 = vsel %vm525, %v714, %v713
        %v716 = vrot.slane %v686, 1
        %v717 = vsel %vm527, %v716, %v715
        %v718 = vrot.slane %v675, 7
        %v719 = vsel %vm515, %v718, %v673
        %v720 = vrot.slane %v677, 6
        %v721 = vsel %vm517, %v720, %v719
        %v722 = vrot.slane %v679, 5
        %v723 = vsel %vm519, %v722, %v721
        %v724 = vrot.slane %v681, 4
        %v725 = vsel %vm521, %v724, %v723
        %v726 = vrot.slane %v683, 3
        %v727 = vsel %vm523, %v726, %v725
        %v728 = vrot.slane %v685, 2
        %v729 = vsel %vm525, %v728, %v727
        %v730 = vrot.slane %v687, 1
        %v731 = vsel %vm527, %v730, %v729
        %v734 = vsub.f32 %v493, %v717
        %v735 = vsub.f32 %v494, %v731
        %v736 = vmul.f32 %v496, %v734
        %v737 = vmul.f32 %v498, %v735
        %v738 = vadd.f32 %v736, %v737
        %739 = vadd.xlane.f32.xlu0 %v738
        %v740 = vpop.xlane.xlu0 %739
        %v741 = vrot.slane %v740, 4
        %v742 = vadd.f32 %v740, %v741
        %v743 = vrot.slane %v742, 2
        %v744 = vadd.f32 %v742, %v743
        %v745 = vrot.slane %v744, 1
        %v746 = vadd.f32 %v744, %v745
        %s747 = vtos %v746
        %v748 = vld [vmem:[#allocation2] sm:$0x1]
        %v749 = vstv %s747
        %v750 = vadd.f32 %v748, %v749
        %vm751 = vcmask 0
        %752 = vst.msk [vmem:[#allocation2] sm:$0x1] %vm751, %v750
        // Predicated region
        $region41: #{dense2sparse_semantic_idf_norm_forward.3} parent=35 // pred_check
          %p753 = pneg %p128
        $region42: #{dense2sparse_semantic_idf_norm_forward.3} parent=35 // pred_check_branch
          %755 = sbr.rel (%p753) target = $region44
        $region43: #{dense2sparse_semantic_idf_norm_forward.3} parent=35 // pred_region
          %s757 = ssub.s32 16, 16
          %758 = vsyncadd [#allocation3], %s757
          %s760 = sshll.u32 [#allocation2], 4
          %s761 = int_to_ptr.vmem [resolvable:$true] %s760
          %763 = dma.vmem_to_hbm [thread:$0]  %s761, 16, %s4, [#allocation3]
        $region44: #{dense2sparse_semantic_idf_norm_forward.3} parent=35 // pred_fallthru
          _
        // Predicated region
        $region45: #{dense2sparse_semantic_idf_norm_forward.3} parent=35 // pred_check
          %p764 = pneg %p128
        $region46: #{dense2sparse_semantic_idf_norm_forward.3} parent=35 // pred_check_branch
          %766 = sbr.rel (%p764) target = $region48
        $region47: #{dense2sparse_semantic_idf_norm_forward.3} parent=35 // pred_region
          %767 = dma.done [#allocation3], 16
        $region48: #{dense2sparse_semantic_idf_norm_forward.3} parent=35 // pred_fallthru
          _
      $region36: #{dense2sparse_semantic_idf_norm_forward.3} parent=5 // pred_fallthru
        _
      %p768 = scmp.le.s32.totalorder 2, %s11
      // Predicated region
      $region49: #{dense2sparse_semantic_idf_norm_forward.3} parent=5 // pred_check
        %p769 = pneg %p768
      $region50: #{dense2sparse_semantic_idf_norm_forward.3} parent=5 // pred_check_branch
        %771 = sbr.rel (%p769) target = $region52
      $region51: #{dense2sparse_semantic_idf_norm_forward.3} parent=5 // pred_region
        %s772 = ssub.s32 %s11, 2
      $region52: #{dense2sparse_semantic_idf_norm_forward.3} parent=5 // pred_fallthru
        _
    $region6: #{dense2sparse_semantic_idf_norm_forward.3} parent=1 // loop_footer
      %s15 = sadd.s32 1, %s11
    $region7: #{dense2sparse_semantic_idf_norm_forward.3} parent=1 // loop_footer_branch
      %10 = sbr.rel target = $region3
    $region8: #{dense2sparse_semantic_idf_norm_forward.3} parent=1 // loop_exit
      _
    %773 = vsyncpa [#allocation3], 1
    %s774 = scalar_lea.sflag [#allocation3], 1
    %775 = vsyncpa %s774, 1

// kernel: dense2sparse_semantic_idf_norm_forward.4
$region0: #{dense2sparse_semantic_idf_norm_forward.4}
  #allocation0 [shape = 'u32[]', space=smem, size = 0x4, offset = 0x4, fixed_abs, tag = 'smem constant byte address 0x4 - core index']
  #allocation1 [shape = 'u32[144,128]{1,0:T(1,128)}', space=vmem, size = 0x12000, scoped, tag = 'internal scratch']
  %s0 = inlined_call_operand.vmem [shape: f32[1,256], index: 0, kind: input, shape index: {}]
  %s1 = inlined_call_operand.hbm [shape: f32[16,8,32], index: 1, kind: input, shape index: {}]
  %s2 = inlined_call_operand.hbm [shape: f32[16,8,256], index: 2, kind: input, shape index: {}]
  %s3 = inlined_call_operand.vmem [shape: f32[16,256], index: 3, kind: input, shape index: {}]
  %s4 = inlined_call_operand.hbm [shape: f32[1,1], index: 4, kind: output, shape index: {}]
  %s5 = sld [smem:[#allocation0]]
  $region61: #{dense2sparse_semantic_idf_norm_forward.4} parent=0
    _
  %s7 = ssub.s32 1, %s5
  %s8 = scalar_select 0, %s7, %s5
  $region1: #{dense2sparse_semantic_idf_norm_forward.4} parent=0
    #allocation2 [shape = 'u8[65536]{0}', space=vmem, size = 0x10000, scoped, tag = 'input window, operand 1']
    #allocation3 [shape = 's32[2]{0}', space=sflag, size = 0x8, scoped, tag = 'scoped memory for dense2sparse_semantic_idf_norm_forward.4']
    #allocation4 [shape = 's32[2]{0}', space=sflag, size = 0x8, scoped, tag = 'scoped memory for dense2sparse_semantic_idf_norm_forward.4']
    #allocation5 [shape = 'u8[131072]{0}', space=vmem, size = 0x20000, scoped, tag = 'input window, operand 2']
    #allocation6 [shape = 's32[2]{0}', space=sflag, size = 0x8, scoped, tag = 'scoped memory for dense2sparse_semantic_idf_norm_forward.4']
    #allocation7 [shape = 'u8[512]{0}', space=vmem, size = 0x400, scoped, tag = 'output window, operand 0, single buffered']
    %9 = vsyncpa [#allocation3], 0
    %s10 = scalar_lea.sflag [#allocation3], 1
    %11 = vsyncpa %s10, 0
    %12 = vsyncpa [#allocation6], 0
    %s13 = scalar_lea.sflag [#allocation6], 1
    %14 = vsyncpa %s13, 0
    %15 = vsyncpa [#allocation4], 0
    loop: start=0, step=1, limit=4
    $region2: #{dense2sparse_semantic_idf_norm_forward.4} parent=1 // loop_pre_header
      _
    $region3: #{dense2sparse_semantic_idf_norm_forward.4} parent=1 // loop_header
      %s17 = sphi 0, %s21
      %p18 = scmp.ge.s32.totalorder %s17, 4
      %s25 = sphi 0, %s25
      %s27 = sphi 0, %s25
      %s28 = sphi 0, %s27
      %s42 = sphi 0, %s28
      %s48 = sphi 0, %s50
      %s51 = sphi 0, %s48
      %s52 = sphi 0, %s51
      %s68 = sphi 0, %s52
      %s74 = sphi 0, %s76
      %s77 = sphi 0, %s74
      %s78 = sphi 0, %s77
      %s94 = sphi 0, %s78
      %s100 = sphi 0, %s102
      %s103 = sphi 0, %s100
      %s104 = sphi 0, %s103
      %s120 = sphi 0, %s104
      %s124 = sphi 0, %s124
      %s126 = sphi 0, %s124
      %s127 = sphi 0, %s126
      %s141 = sphi 0, %s127
    $region4: #{dense2sparse_semantic_idf_norm_forward.4} parent=1 // loop_header_branch
      %20 = sbr.rel (%p18) target = $region8
    $region5: #{dense2sparse_semantic_idf_norm_forward.4} parent=1 // loop_body
      %s22 = ssub.s32 %s17, 1
      %s23 = ssub.s32 %s17, 2
      %s24 = sadd.s32 %s17, 1
      %s26 = sadd.s32 %s25, 1
      %p29 = scmp.eq.s32.totalorder %s17, 1
      %p30 = scmp.ne.s32.totalorder %s25, %s27
      %p31 = scmp.eq.s32.totalorder %s17, 0
      %p32 = por %p30, %p31
      %p33 = scmp.ne.s32.totalorder %s25, %s27
      %p34 = scmp.eq.s32.totalorder %s22, 1
      %p35 = por %p33, %p34
      %p36 = scmp.ne.s32.totalorder %s27, %s28
      %p37 = scmp.eq.s32.totalorder %s22, 0
      %p38 = por %p36, %p37
      %p39 = scmp.ne.s32.totalorder %s27, %s28
      %p40 = scmp.eq.s32.totalorder %s23, 1
      %p41 = por %p39, %p40
      %p43 = scmp.ne.s32.totalorder %s28, %s42
      %p44 = scmp.eq.s32.totalorder %s23, 0
      %p45 = por %p43, %p44
      %s46 = ssub.s32 %s17, %s24
      %p47 = scmp.eq.s32.totalorder %s46, 0
      %s49 = sadd.s32 %s48, 1
      %s50 = scalar_select %p47, %s48, %s49
      %p53 = pneg %p47
      %p54 = scmp.eq.s32.totalorder %s17, 1
      %p55 = por %p53, %p54
      %p56 = scmp.ne.s32.totalorder %s48, %s51
      %p57 = scmp.eq.s32.totalorder %s17, 0
      %p58 = por %p56, %p57
      %p59 = scmp.ne.s32.totalorder %s48, %s51
      %p60 = scmp.eq.s32.totalorder %s22, 1
      %p61 = por %p59, %p60
      %p62 = scmp.ne.s32.totalorder %s51, %s52
      %p63 = scmp.eq.s32.totalorder %s22, 0
      %p64 = por %p62, %p63
      %p65 = scmp.ne.s32.totalorder %s51, %s52
      %p66 = scmp.eq.s32.totalorder %s23, 1
      %p67 = por %p65, %p66
      %p69 = scmp.ne.s32.totalorder %s52, %s68
      %p70 = scmp.eq.s32.totalorder %s23, 0
      %p71 = por %p69, %p70
      %s72 = ssub.s32 %s17, %s24
      %p73 = scmp.eq.s32.totalorder %s72, 0
      %s75 = sadd.s32 %s74, 1
      %s76 = scalar_select %p73, %s74, %s75
      %p79 = pneg %p73
      %p80 = scmp.eq.s32.totalorder %s17, 1
      %p81 = por %p79, %p80
      %p82 = scmp.ne.s32.totalorder %s74, %s77
      %p83 = scmp.eq.s32.totalorder %s17, 0
      %p84 = por %p82, %p83
      %p85 = scmp.ne.s32.totalorder %s74, %s77
      %p86 = scmp.eq.s32.totalorder %s22, 1
      %p87 = por %p85, %p86
      %p88 = scmp.ne.s32.totalorder %s77, %s78
      %p89 = scmp.eq.s32.totalorder %s22, 0
      %p90 = por %p88, %p89
      %p91 = scmp.ne.s32.totalorder %s77, %s78
      %p92 = scmp.eq.s32.totalorder %s23, 1
      %p93 = por %p91, %p92
      %p95 = scmp.ne.s32.totalorder %s78, %s94
      %p96 = scmp.eq.s32.totalorder %s23, 0
      %p97 = por %p95, %p96
      %s98 = ssub.s32 %s17, %s24
      %p99 = scmp.eq.s32.totalorder %s98, 0
      %s101 = sadd.s32 %s100, 1
      %s102 = scalar_select %p99, %s100, %s101
      %p105 = pneg %p99
      %p106 = scmp.eq.s32.totalorder %s17, 1
      %p107 = por %p105, %p106
      %p108 = scmp.ne.s32.totalorder %s100, %s103
      %p109 = scmp.eq.s32.totalorder %s17, 0
      %p110 = por %p108, %p109
      %p111 = scmp.ne.s32.totalorder %s100, %s103
      %p112 = scmp.eq.s32.totalorder %s22, 1
      %p113 = por %p111, %p112
      %p114 = scmp.ne.s32.totalorder %s103, %s104
      %p115 = scmp.eq.s32.totalorder %s22, 0
      %p116 = por %p114, %p115
      %p117 = scmp.ne.s32.totalorder %s103, %s104
      %p118 = scmp.eq.s32.totalorder %s23, 1
      %p119 = por %p117, %p118
      %p121 = scmp.ne.s32.totalorder %s104, %s120
      %p122 = scmp.eq.s32.totalorder %s23, 0
      %p123 = por %p121, %p122
      %s125 = sadd.s32 %s124, 1
      %p128 = scmp.eq.s32.totalorder %s17, 1
      %p129 = scmp.ne.s32.totalorder %s124, %s126
      %p130 = scmp.eq.s32.totalorder %s17, 0
      %p131 = por %p129, %p130
      %p132 = scmp.ne.s32.totalorder %s124, %s126
      %p133 = scmp.eq.s32.totalorder %s22, 1
      %p134 = por %p132, %p133
      %p135 = scmp.ne.s32.totalorder %s126, %s127
      %p136 = scmp.eq.s32.totalorder %s22, 0
      %p137 = por %p135, %p136
      %p138 = scmp.ne.s32.totalorder %s126, %s127
      %p139 = scmp.eq.s32.totalorder %s23, 1
      %p140 = por %p138, %p139
      %p142 = scmp.ne.s32.totalorder %s127, %s141
      %p143 = scmp.eq.s32.totalorder %s23, 0
      %p144 = por %p142, %p143
      %p145 = scmp.le.s32.totalorder 1, %s17
      %p146 = scmp.lt.s32.totalorder %s17, 3
      %p147 = pnand %p145, %p146
      %p148 = pneg %p147
      // Predicated region
      $region9: #{dense2sparse_semantic_idf_norm_forward.4} parent=5 // pred_check
        _
      $region10: #{dense2sparse_semantic_idf_norm_forward.4} parent=5 // pred_check_branch
        %150 = sbr.rel (%p147) target = $region12
      $region11: #{dense2sparse_semantic_idf_norm_forward.4} parent=5 // pred_region
        %s151 = ssub.s32 %s17, 1
        // Predicated region
        $region13: #{dense2sparse_semantic_idf_norm_forward.4} parent=11 // pred_check
          %p152 = pneg %p38
        $region14: #{dense2sparse_semantic_idf_norm_forward.4} parent=11 // pred_check_branch
          %154 = sbr.rel (%p152) target = $region16
        $region15: #{dense2sparse_semantic_idf_norm_forward.4} parent=11 // pred_region
          _
        $region16: #{dense2sparse_semantic_idf_norm_forward.4} parent=11 // pred_fallthru
          _
      $region12: #{dense2sparse_semantic_idf_norm_forward.4} parent=5 // pred_fallthru
        _
      %p155 = scmp.lt.s32.totalorder %s17, 2
      // Predicated region
      $region17: #{dense2sparse_semantic_idf_norm_forward.4} parent=5 // pred_check
        %p156 = pneg %p155
      $region18: #{dense2sparse_semantic_idf_norm_forward.4} parent=5 // pred_check_branch
        %158 = sbr.rel (%p156) target = $region20
      $region19: #{dense2sparse_semantic_idf_norm_forward.4} parent=5 // pred_region
        // Predicated region
        $region21: #{dense2sparse_semantic_idf_norm_forward.4} parent=19 // pred_check
          %p159 = pneg %p58
        $region22: #{dense2sparse_semantic_idf_norm_forward.4} parent=19 // pred_check_branch
          %161 = sbr.rel (%p159) target = $region24
        $region23: #{dense2sparse_semantic_idf_norm_forward.4} parent=19 // pred_region
          %s162 = sand.u32 %s48, 1
          %s163 = scalar_lea.sflag [#allocation3], %s162
          %s164 = sand.u32 %s48, 1
          %s165 = smul.addr %s164, 64
          %s166 = scalar_lea.vmem [#allocation2], %s165
          %s167 = smul.u32 8, %s17
          %s169 = ssub.s32 1024, 1024
          %170 = vsyncadd %s163, %s169
          %s171 = smul.addr %s167, 128
          %s172 = scalar_lea.hbm %s1, %s171
          %s173 = sshll.u32 %s166, 4
          %s174 = int_to_ptr.vmem [resolvable:$true] %s173
          %179 = dma.hbm_to_vmem [thread:$0]  %s172, 1024, %s174, %s163, 128, 128, 8
        $region24: #{dense2sparse_semantic_idf_norm_forward.4} parent=19 // pred_fallthru
          _
        // Predicated region
        $region25: #{dense2sparse_semantic_idf_norm_forward.4} parent=19 // pred_check
          %p180 = pneg %p84
        $region26: #{dense2sparse_semantic_idf_norm_forward.4} parent=19 // pred_check_branch
          %182 = sbr.rel (%p180) target = $region28
        $region27: #{dense2sparse_semantic_idf_norm_forward.4} parent=19 // pred_region
          %s183 = sand.u32 %s74, 1
          %s184 = scalar_lea.sflag [#allocation6], %s183
          %s185 = sand.u32 %s74, 1
          %s186 = smul.addr %s185, 128
          %s187 = scalar_lea.vmem [#allocation5], %s186
          %s188 = smul.u32 8, %s17
          %s190 = ssub.s32 2048, 2048
          %191 = vsyncadd %s184, %s190
          %s192 = smul.addr %s188, 2
          %s193 = smul.addr %s192, 128
          %s194 = scalar_lea.hbm %s2, %s193
          %s195 = sshll.u32 %s187, 4
          %s196 = int_to_ptr.vmem [resolvable:$true] %s195
          %201 = dma.hbm_to_vmem [thread:$0]  %s194, 2048, %s196, %s184, 256, 256, 16
        $region28: #{dense2sparse_semantic_idf_norm_forward.4} parent=19 // pred_fallthru
          _
        // Predicated region
        $region29: #{dense2sparse_semantic_idf_norm_forward.4} parent=19 // pred_check
          %p202 = pneg %p110
        $region30: #{dense2sparse_semantic_idf_norm_forward.4} parent=19 // pred_check_branch
          %204 = sbr.rel (%p202) target = $region32
        $region31: #{dense2sparse_semantic_idf_norm_forward.4} parent=19 // pred_region
          %p205 = scmp.lt.s32.totalorder %s17, 1
          %s206 = scalar_select %p205, %s17, 1
          %s207 = smul.addr %s206, 2
          %s208 = smul.addr %s207, 8
          %s209 = scalar_lea.vmem %s3, %s208
        $region32: #{dense2sparse_semantic_idf_norm_forward.4} parent=19 // pred_fallthru
          _
      $region20: #{dense2sparse_semantic_idf_norm_forward.4} parent=5 // pred_fallthru
        _
      %p210 = scmp.le.s32.totalorder 1, %s17
      %p211 = scmp.lt.s32.totalorder %s17, 3
      %p212 = pnand %p210, %p211
      %p213 = pneg %p212
      // Predicated region
      $region33: #{dense2sparse_semantic_idf_norm_forward.4} parent=5 // pred_check
        _
      $region34: #{dense2sparse_semantic_idf_norm_forward.4} parent=5 // pred_check_branch
        %215 = sbr.rel (%p212) target = $region36
      $region35: #{dense2sparse_semantic_idf_norm_forward.4} parent=5 // pred_region
        %s216 = ssub.s32 %s17, 1
        %s217 = sand.u32 %s51, 1
        %s218 = scalar_lea.sflag [#allocation3], %s217
        %s219 = sand.u32 %s51, 1
        %s220 = smul.addr %s219, 64
        %s221 = scalar_lea.vmem [#allocation2], %s220
        // Predicated region
        $region37: #{dense2sparse_semantic_idf_norm_forward.4} parent=35 // pred_check
          %p222 = pneg %p64
        $region38: #{dense2sparse_semantic_idf_norm_forward.4} parent=35 // pred_check_branch
          %224 = sbr.rel (%p222) target = $region40
        $region39: #{dense2sparse_semantic_idf_norm_forward.4} parent=35 // pred_region
          %225 = dma.done %s218, 1024
        $region40: #{dense2sparse_semantic_idf_norm_forward.4} parent=35 // pred_fallthru
          _
        %s226 = sand.u32 %s77, 1
        %s227 = scalar_lea.sflag [#allocation6], %s226
        %s228 = sand.u32 %s77, 1
        %s229 = smul.addr %s228, 128
        %s230 = scalar_lea.vmem [#allocation5], %s229
        // Predicated region
        $region41: #{dense2sparse_semantic_idf_norm_forward.4} parent=35 // pred_check
          %p231 = pneg %p90
        $region42: #{dense2sparse_semantic_idf_norm_forward.4} parent=35 // pred_check_branch
          %233 = sbr.rel (%p231) target = $region44
        $region43: #{dense2sparse_semantic_idf_norm_forward.4} parent=35 // pred_region
          %234 = dma.done %s227, 2048
        $region44: #{dense2sparse_semantic_idf_norm_forward.4} parent=35 // pred_fallthru
          _
        %p235 = pneg %p38
        %p236 = pneg %p35
        %s237 = sand.u32 %s51, 1
        %s238 = scalar_lea.sflag [#allocation3], %s237
        %s239 = sand.u32 %s51, 1
        %s240 = smul.addr %s239, 64
        %s241 = scalar_lea.vmem [#allocation2], %s240
        %p242 = pneg %p64
        %p243 = pneg %p61
        %s244 = sand.u32 %s77, 1
        %s245 = scalar_lea.sflag [#allocation6], %s244
        %s246 = sand.u32 %s77, 1
        %s247 = smul.addr %s246, 128
        %s248 = scalar_lea.vmem [#allocation5], %s247
        %p249 = pneg %p90
        %p250 = pneg %p87
        %p251 = scmp.lt.s32.totalorder %s22, 1
        %s252 = scalar_select %p251, %s22, 1
        %s253 = smul.addr %s252, 2
        %s254 = smul.addr %s253, 8
        %s255 = scalar_lea.vmem %s3, %s254
        %p256 = pneg %p116
        %p257 = pneg %p113
        %p258 = pneg %p137
        %p259 = pneg %p134
        %s260 = smul.u32 8, %s22
        %s261 = smul.u32 8, %s22
        %p262 = scmp.lt.s32.totalorder %s22, 1
        %s263 = scalar_select %p262, %s22, 1
        %s264 = smul.addr %s263, 2
        %s265 = smul.addr %s264, 8
        %s266 = scalar_lea.vmem %s3, %s265
        %p267 = scmp.eq.s32.totalorder %s22, 0
        // Predicated region
        $region45: #{dense2sparse_semantic_idf_norm_forward.4} parent=35 // pred_check
          %p268 = pneg %p267
        $region46: #{dense2sparse_semantic_idf_norm_forward.4} parent=35 // pred_check_branch
          %270 = sbr.rel (%p268) target = $region48
        $region47: #{dense2sparse_semantic_idf_norm_forward.4} parent=35 // pred_region
          %vm271 = vcmask 0
          %272 = vst.msk [vmem:[#allocation7] sm:$0x1] %vm271, 0.0
        $region48: #{dense2sparse_semantic_idf_norm_forward.4} parent=35 // pred_fallthru
          _
        %v273 = vld [vmem:[%s221] sm:$0xff]
        %v274 = vld [vmem:[%s221 + $0x8] sm:$0xff]
        %v275 = vld [vmem:[%s221 + $0x10] sm:$0xff]
        %v276 = vld [vmem:[%s221 + $0x18] sm:$0xff]
        %v277 = vld [vmem:[%s221 + $0x20] sm:$0xff]
        %v278 = vld [vmem:[%s221 + $0x28] sm:$0xff]
        %v279 = vld [vmem:[%s221 + $0x30] sm:$0xff]
        %v280 = vld [vmem:[%s221 + $0x38] sm:$0xff]
        %vm281 = vcmask 261120
        %v282 = vsel %vm281, %v273, 0.0
        %283 = vadd.xlane.f32.xlu0 %v282
        %v284 = vpop.xlane.xlu0 %283
        %v285 = vsel %vm281, %v274, 0.0
        %286 = vadd.xlane.f32.xlu0 %v285
        %v287 = vpop.xlane.xlu0 %286
        %v288 = vsel %vm281, %v275, 0.0
        %289 = vadd.xlane.f32.xlu0 %v288
        %v290 = vpop.xlane.xlu0 %289
        %v291 = vsel %vm281, %v276, 0.0
        %292 = vadd.xlane.f32.xlu0 %v291
        %v293 = vpop.xlane.xlu0 %292
        %v294 = vsel %vm281, %v277, 0.0
        %295 = vadd.xlane.f32.xlu0 %v294
        %v296 = vpop.xlane.xlu0 %295
        %v297 = vsel %vm281, %v278, 0.0
        %298 = vadd.xlane.f32.xlu0 %v297
        %v299 = vpop.xlane.xlu0 %298
        %v300 = vsel %vm281, %v279, 0.0
        %301 = vadd.xlane.f32.xlu0 %v300
        %v302 = vpop.xlane.xlu0 %301
        %v303 = vsel %vm281, %v280, 0.0
        %304 = vadd.xlane.f32.xlu0 %v303
        %v305 = vpop.xlane.xlu0 %304
        %v306 = vld [vmem:[%s230] sm:$0xff]
        %v307 = vld [vmem:[%s230 + $0x8] sm:$0xff]
        %v308 = vld [vmem:[%s230 + $0x10] sm:$0xff]
        %v309 = vld [vmem:[%s230 + $0x18] sm:$0xff]
        %v310 = vld [vmem:[%s230 + $0x20] sm:$0xff]
        %v311 = vld [vmem:[%s230 + $0x28] sm:$0xff]
        %v312 = vld [vmem:[%s230 + $0x30] sm:$0xff]
        %v313 = vld [vmem:[%s230 + $0x38] sm:$0xff]
        %v314 = vld [vmem:[%s230 + $0x40] sm:$0xff]
        %v315 = vld [vmem:[%s230 + $0x48] sm:$0xff]
        %v316 = vld [vmem:[%s230 + $0x50] sm:$0xff]
        %v317 = vld [vmem:[%s230 + $0x58] sm:$0xff]
        %v318 = vld [vmem:[%s230 + $0x60] sm:$0xff]
        %v319 = vld [vmem:[%s230 + $0x68] sm:$0xff]
        %v320 = vld [vmem:[%s230 + $0x70] sm:$0xff]
        %v321 = vld [vmem:[%s230 + $0x78] sm:$0xff]
        %v322 = vmul.f32 %v284, %v306
        %v323 = vmul.f32 %v284, %v307
        %v324 = vmul.f32 %v287, %v308
        %v325 = vmul.f32 %v287, %v309
        %v326 = vmul.f32 %v290, %v310
        %v327 = vmul.f32 %v290, %v311
        %v328 = vmul.f32 %v293, %v312
        %v329 = vmul.f32 %v293, %v313
        %v330 = vmul.f32 %v296, %v314
        %v331 = vmul.f32 %v296, %v315
        %v332 = vmul.f32 %v299, %v316
        %v333 = vmul.f32 %v299, %v317
        %v334 = vmul.f32 %v302, %v318
        %v335 = vmul.f32 %v302, %v319
        %v336 = vmul.f32 %v305, %v320
        %v337 = vmul.f32 %v305, %v321
        %v338 = vrot.slane %v322, 4
        %v339 = vadd.f32 %v322, %v338
        %v340 = vrot.slane %v339, 2
        %v341 = vadd.f32 %v339, %v340
        %v342 = vrot.slane %v341, 1
        %v343 = vadd.f32 %v341, %v342
        %v344 = vrot.slane %v323, 4
        %v345 = vadd.f32 %v323, %v344
        %v346 = vrot.slane %v345, 2
        %v347 = vadd.f32 %v345, %v346
        %v348 = vrot.slane %v347, 1
        %v349 = vadd.f32 %v347, %v348
        %v350 = vrot.slane %v324, 4
        %v351 = vadd.f32 %v324, %v350
        %v352 = vrot.slane %v351, 2
        %v353 = vadd.f32 %v351, %v352
        %v354 = vrot.slane %v353, 1
        %v355 = vadd.f32 %v353, %v354
        %v356 = vrot.slane %v325, 4
        %v357 = vadd.f32 %v325, %v356
        %v358 = vrot.slane %v357, 2
        %v359 = vadd.f32 %v357, %v358
        %v360 = vrot.slane %v359, 1
        %v361 = vadd.f32 %v359, %v360
        %v362 = vrot.slane %v326, 4
        %v363 = vadd.f32 %v326, %v362
        %v364 = vrot.slane %v363, 2
        %v365 = vadd.f32 %v363, %v364
        %v366 = vrot.slane %v365, 1
        %v367 = vadd.f32 %v365, %v366
        %v368 = vrot.slane %v327, 4
        %v369 = vadd.f32 %v327, %v368
        %v370 = vrot.slane %v369, 2
        %v371 = vadd.f32 %v369, %v370
        %v372 = vrot.slane %v371, 1
        %v373 = vadd.f32 %v371, %v372
        %v374 = vrot.slane %v328, 4
        %v375 = vadd.f32 %v328, %v374
        %v376 = vrot.slane %v375, 2
        %v377 = vadd.f32 %v375, %v376
        %v378 = vrot.slane %v377, 1
        %v379 = vadd.f32 %v377, %v378
        %v380 = vrot.slane %v329, 4
        %v381 = vadd.f32 %v329, %v380
        %v382 = vrot.slane %v381, 2
        %v383 = vadd.f32 %v381, %v382
        %v384 = vrot.slane %v383, 1
        %v385 = vadd.f32 %v383, %v384
        %v386 = vrot.slane %v330, 4
        %v387 = vadd.f32 %v330, %v386
        %v388 = vrot.slane %v387, 2
        %v389 = vadd.f32 %v387, %v388
        %v390 = vrot.slane %v389, 1
        %v391 = vadd.f32 %v389, %v390
        %v392 = vrot.slane %v331, 4
        %v393 = vadd.f32 %v331, %v392
        %v394 = vrot.slane %v393, 2
        %v395 = vadd.f32 %v393, %v394
        %v396 = vrot.slane %v395, 1
        %v397 = vadd.f32 %v395, %v396
        %v398 = vrot.slane %v332, 4
        %v399 = vadd.f32 %v332, %v398
        %v400 = vrot.slane %v399, 2
        %v401 = vadd.f32 %v399, %v400
        %v402 = vrot.slane %v401, 1
        %v403 = vadd.f32 %v401, %v402
        %v404 = vrot.slane %v333, 4
        %v405 = vadd.f32 %v333, %v404
        %v406 = vrot.slane %v405, 2
        %v407 = vadd.f32 %v405, %v406
        %v408 = vrot.slane %v407, 1
        %v409 = vadd.f32 %v407, %v408
        %v410 = vrot.slane %v334, 4
        %v411 = vadd.f32 %v334, %v410
        %v412 = vrot.slane %v411, 2
        %v413 = vadd.f32 %v411, %v412
        %v414 = vrot.slane %v413, 1
        %v415 = vadd.f32 %v413, %v414
        %v416 = vrot.slane %v335, 4
        %v417 = vadd.f32 %v335, %v416
        %v418 = vrot.slane %v417, 2
        %v419 = vadd.f32 %v417, %v418
        %v420 = vrot.slane %v419, 1
        %v421 = vadd.f32 %v419, %v420
        %v422 = vrot.slane %v336, 4
        %v423 = vadd.f32 %v336, %v422
        %v424 = vrot.slane %v423, 2
        %v425 = vadd.f32 %v423, %v424
        %v426 = vrot.slane %v425, 1
        %v427 = vadd.f32 %v425, %v426
        %v428 = vrot.slane %v337, 4
        %v429 = vadd.f32 %v337, %v428
        %v430 = vrot.slane %v429, 2
        %v431 = vadd.f32 %v429, %v430
        %v432 = vrot.slane %v431, 1
        %v433 = vadd.f32 %v431, %v432
        %v434 = vld [vmem:[%s0] sm:$0x3]
        %v436 = vlaneseq
        %v437 = vshrl.u32 %v436, 7
        %v438 = vsub.s32 0, %v437
        %v439 = vrot.slane %v434, %v438
        %v440 = vlaneseq
        %v441 = vshrl.u32 %v440, 7
        %v442 = vsub.s32 1, %v441
        %v443 = vrot.slane %v434, %v442
        %vm446 = vcmask 1040384
        %v447 = vsel %vm446, %v439, -inf
        %v448 = vsel %vm446, %v443, -inf
        %v449 = vmax.f32 %v447, %v448
        %450 = vmax.xlane.f32.xlu0 %v449
        %v451 = vpop.xlane.xlu0 %450
        %v453 = vlaneseq
        %v454 = vshrl.u32 %v453, 7
        %v455 = vsub.s32 0, %v454
        %v456 = vrot.slane %v451, %v455
        %v458 = vsub.f32 %v434, %v456
        %v459 = vmul.f32 %v458, 1.442695
        %v460 = vpow.pop %v459
        %v462 = vlaneseq
        %v463 = vshrl.u32 %v462, 7
        %v464 = vsub.s32 0, %v463
        %v465 = vrot.slane %v460, %v464
        %v466 = vlaneseq
        %v467 = vshrl.u32 %v466, 7
        %v468 = vsub.s32 1, %v467
        %v469 = vrot.slane %v460, %v468
        %v472 = vsel %vm446, %v465, 0.0
        %v473 = vsel %vm446, %v469, 0.0
        %v474 = vadd.f32 %v472, %v473
        %475 = vadd.xlane.f32.xlu0 %v474
        %v476 = vpop.xlane.xlu0 %475
        %v477 = vrcp.pop %v476
        %v479 = vlaneseq
        %v480 = vshrl.u32 %v479, 7
        %v481 = vsub.s32 0, %v480
        %v482 = vrot.slane %v477, %v481
        %v484 = vmul.f32 %v460, %v482
        %v485 = vld [vmem:[%s266] sm:$0xff]
        %v486 = vld [vmem:[%s266 + $0x8] sm:$0xff]
        %v487 = vmax.f32 %v485, %v486
        %488 = vmax.xlane.f32.xlu0 %v487
        %v489 = vpop.xlane.xlu0 %488
        %v490 = vsub.f32 %v485, %v489
        %v491 = vsub.f32 %v486, %v489
        %v492 = vmul.f32 %v490, 1.442695
        %v493 = vpow.pop %v492
        %v494 = vmul.f32 %v491, 1.442695
        %v495 = vpow.pop %v494
        %v496 = vadd.f32 %v493, %v495
        %497 = vadd.xlane.f32.xlu0 %v496
        %v498 = vpop.xlane.xlu0 %497
        %v499 = vrcp.pop %v498
        %v500 = vmul.f32 %v493, %v499
        %v501 = vmul.f32 %v495, %v499
        %v503 = vlaneseq
        %v504 = vshrl.u32 %v503, 7
        %v505 = vsub.s32 0, %v504
        %v506 = vrot.slane %v484, %v505
        %v507 = vlaneseq
        %v508 = vshrl.u32 %v507, 7
        %v509 = vsub.s32 1, %v508
        %v510 = vrot.slane %v484, %v509
        %v513 = vmul.f32 %v506, %v500
        %v514 = vmul.f32 %v510, %v501
        %v515 = vmax.f32 %v513, %v514
        %516 = vmax.xlane.f32.xlu0 %v515
        %v517 = vpop.xlane.xlu0 %516
        %v518 = vsub.f32 %v513, %v517
        %v519 = vsub.f32 %v514, %v517
        %v520 = vmul.f32 %v518, 1.442695
        %v521 = vpow.pop %v520
        %v522 = vmul.f32 %v519, 1.442695
        %v523 = vpow.pop %v522
        %v524 = vadd.f32 %v521, %v523
        %525 = vadd.xlane.f32.xlu0 %v524
        %v526 = vpop.xlane.xlu0 %525
        %v527 = vlog2.pop %v526
        %v528 = vmul.f32 %v527, 0.6931472
        %v529 = vsub.f32 %v518, %v528
        %v530 = vsub.f32 %v519, %v528
        %v531 = vmul.f32 %v529, 1.442695
        %v532 = vpow.pop %v531
        %v533 = vmul.f32 %v530, 1.442695
        %v534 = vpow.pop %v533
        %vm551 = vcmask 1041409
        %v552 = vsel %vm551, %v355, %v343
        %vm553 = vcmask 1042434
        %v554 = vsel %vm553, %v367, %v552
        %vm555 = vcmask 1043459
        %v556 = vsel %vm555, %v379, %v554
        %vm557 = vcmask 1044484
        %v558 = vsel %vm557, %v391, %v556
        %vm559 = vcmask 1045509
        %v560 = vsel %vm559, %v403, %v558
        %vm561 = vcmask 1046534
        %v562 = vsel %vm561, %v415, %v560
        %vm563 = vcmask 1047559
        %v564 = vsel %vm563, %v427, %v562
        %v565 = vsel %vm551, %v361, %v349
        %v566 = vsel %vm553, %v373, %v565
        %v567 = vsel %vm555, %v385, %v566
        %v568 = vsel %vm557, %v397, %v567
        %v569 = vsel %vm559, %v409, %v568
        %v570 = vsel %vm561, %v421, %v569
        %v571 = vsel %vm563, %v433, %v570
        %v574 = vmax.f32 %v564, %v571
        %575 = vmax.xlane.f32.xlu0 %v574
        %v576 = vpop.xlane.xlu0 %575
        %v578 = vrot.slane %v576, 1
        %v579 = vrot.slane %v576, 2
        %v580 = vrot.slane %v576, 3
        %v581 = vrot.slane %v576, 4
        %v582 = vrot.slane %v576, 5
        %v583 = vrot.slane %v576, 6
        %v584 = vrot.slane %v576, 7
        %v593 = vsub.f32 %v343, %v576
        %v594 = vsub.f32 %v349, %v576
        %v595 = vsub.f32 %v355, %v578
        %v596 = vsub.f32 %v361, %v578
        %v597 = vsub.f32 %v367, %v579
        %v598 = vsub.f32 %v373, %v579
        %v599 = vsub.f32 %v379, %v580
        %v600 = vsub.f32 %v385, %v580
        %v601 = vsub.f32 %v391, %v581
        %v602 = vsub.f32 %v397, %v581
        %v603 = vsub.f32 %v403, %v582
        %v604 = vsub.f32 %v409, %v582
        %v605 = vsub.f32 %v415, %v583
        %v606 = vsub.f32 %v421, %v583
        %v607 = vsub.f32 %v427, %v584
        %v608 = vsub.f32 %v433, %v584
        %v609 = vmul.f32 %v593, 1.442695
        %v610 = vpow.pop %v609
        %v611 = vmul.f32 %v594, 1.442695
        %v612 = vpow.pop %v611
        %v613 = vmul.f32 %v595, 1.442695
        %v614 = vpow.pop %v613
        %v615 = vmul.f32 %v596, 1.442695
        %v616 = vpow.pop %v615
        %v617 = vmul.f32 %v597, 1.442695
        %v618 = vpow.pop %v617
        %v619 = vmul.f32 %v598, 1.442695
        %v620 = vpow.pop %v619
        %v621 = vmul.f32 %v599, 1.442695
        %v622 = vpow.pop %v621
        %v623 = vmul.f32 %v600, 1.442695
        %v624 = vpow.pop %v623
        %v625 = vmul.f32 %v601, 1.442695
        %v626 = vpow.pop %v625
        %v627 = vmul.f32 %v602, 1.442695
        %v628 = vpow.pop %v627
        %v629 = vmul.f32 %v603, 1.442695
        %v630 = vpow.pop %v629
        %v631 = vmul.f32 %v604, 1.442695
        %v632 = vpow.pop %v631
        %v633 = vmul.f32 %v605, 1.442695
        %v634 = vpow.pop %v633
        %v635 = vmul.f32 %v606, 1.442695
        %v636 = vpow.pop %v635
        %v637 = vmul.f32 %v607, 1.442695
        %v638 = vpow.pop %v637
        %v639 = vmul.f32 %v608, 1.442695
        %v640 = vpow.pop %v639
        %v657 = vrot.slane %v614, 7
        %v658 = vsel %vm551, %v657, %v610
        %v659 = vrot.slane %v618, 6
        %v660 = vsel %vm553, %v659, %v658
        %v661 = vrot.slane %v622, 5
        %v662 = vsel %vm555, %v661, %v660
        %v663 = vrot.slane %v626, 4
        %v664 = vsel %vm557, %v663, %v662
        %v665 = vrot.slane %v630, 3
        %v666 = vsel %vm559, %v665, %v664
        %v667 = vrot.slane %v634, 2
        %v668 = vsel %vm561, %v667, %v666
        %v669 = vrot.slane %v638, 1
        %v670 = vsel %vm563, %v669, %v668
        %v671 = vrot.slane %v616, 7
        %v672 = vsel %vm551, %v671, %v612
        %v673 = vrot.slane %v620, 6
        %v674 = vsel %vm553, %v673, %v672
        %v675 = vrot.slane %v624, 5
        %v676 = vsel %vm555, %v675, %v674
        %v677 = vrot.slane %v628, 4
        %v678 = vsel %vm557, %v677, %v676
        %v679 = vrot.slane %v632, 3
        %v680 = vsel %vm559, %v679, %v678
        %v681 = vrot.slane %v636, 2
        %v682 = vsel %vm561, %v681, %v680
        %v683 = vrot.slane %v640, 1
        %v684 = vsel %vm563, %v683, %v682
        %v687 = vadd.f32 %v670, %v684
        %688 = vadd.xlane.f32.xlu0 %v687
        %v689 = vpop.xlane.xlu0 %688
        %v690 = vlog2.pop %v689
        %v691 = vmul.f32 %v690, 0.6931472
        %v693 = vrot.slane %v691, 1
        %v694 = vrot.slane %v691, 2
        %v695 = vrot.slane %v691, 3
        %v696 = vrot.slane %v691, 4
        %v697 = vrot.slane %v691, 5
        %v698 = vrot.slane %v691, 6
        %v699 = vrot.slane %v691, 7
        %v708 = vsub.f32 %v593, %v691
        %v709 = vsub.f32 %v594, %v691
        %v710 = vsub.f32 %v595, %v693
        %v711 = vsub.f32 %v596, %v693
        %v712 = vsub.f32 %v597, %v694
        %v713 = vsub.f32 %v598, %v694
        %v714 = vsub.f32 %v599, %v695
        %v715 = vsub.f32 %v600, %v695
        %v716 = vsub.f32 %v601, %v696
        %v717 = vsub.f32 %v602, %v696
        %v718 = vsub.f32 %v603, %v697
        %v719 = vsub.f32 %v604, %v697
        %v720 = vsub.f32 %v605, %v698
        %v721 = vsub.f32 %v606, %v698
        %v722 = vsub.f32 %v607, %v699
        %v723 = vsub.f32 %v608, %v699
        %v740 = vrot.slane %v710, 7
        %v741 = vsel %vm551, %v740, %v708
        %v742 = vrot.slane %v712, 6
        %v743 = vsel %vm553, %v742, %v741
        %v744 = vrot.slane %v714, 5
        %v745 = vsel %vm555, %v744, %v743
        %v746 = vrot.slane %v716, 4
        %v747 = vsel %vm557, %v746, %v745
        %v748 = vrot.slane %v718, 3
        %v749 = vsel %vm559, %v748, %v747
        %v750 = vrot.slane %v720, 2
        %v751 = vsel %vm561, %v750, %v749
        %v752 = vrot.slane %v722, 1
        %v753 = vsel %vm563, %v752, %v751
        %v754 = vrot.slane %v711, 7
        %v755 = vsel %vm551, %v754, %v709
        %v756 = vrot.slane %v713, 6
        %v757 = vsel %vm553, %v756, %v755
        %v758 = vrot.slane %v715, 5
        %v759 = vsel %vm555, %v758, %v757
        %v760 = vrot.slane %v717, 4
        %v761 = vsel %vm557, %v760, %v759
        %v762 = vrot.slane %v719, 3
        %v763 = vsel %vm559, %v762, %v761
        %v764 = vrot.slane %v721, 2
        %v765 = vsel %vm561, %v764, %v763
        %v766 = vrot.slane %v723, 1
        %v767 = vsel %vm563, %v766, %v765
        %v770 = vsub.f32 %v529, %v753
        %v771 = vsub.f32 %v530, %v767
        %v772 = vmul.f32 %v532, %v770
        %v773 = vmul.f32 %v534, %v771
        %v774 = vadd.f32 %v772, %v773
        %775 = vadd.xlane.f32.xlu0 %v774
        %v776 = vpop.xlane.xlu0 %775
        %v777 = vrot.slane %v776, 4
        %v778 = vadd.f32 %v776, %v777
        %v779 = vrot.slane %v778, 2
        %v780 = vadd.f32 %v778, %v779
        %v781 = vrot.slane %v780, 1
        %v782 = vadd.f32 %v780, %v781
        %s783 = vtos %v782
        %v784 = vld [vmem:[#allocation7] sm:$0x1]
        %v785 = vstv %s783
        %v786 = vadd.f32 %v784, %v785
        %vm787 = vcmask 0
        %788 = vst.msk [vmem:[#allocation7] sm:$0x1] %vm787, %v786
        // Predicated region
        $region49: #{dense2sparse_semantic_idf_norm_forward.4} parent=35 // pred_check
          %p789 = pneg %p134
        $region50: #{dense2sparse_semantic_idf_norm_forward.4} parent=35 // pred_check_branch
          %791 = sbr.rel (%p789) target = $region52
        $region51: #{dense2sparse_semantic_idf_norm_forward.4} parent=35 // pred_region
          %s793 = ssub.s32 16, 16
          %794 = vsyncadd [#allocation4], %s793
          %s796 = sshll.u32 [#allocation7], 4
          %s797 = int_to_ptr.vmem [resolvable:$true] %s796
          %799 = dma.vmem_to_hbm [thread:$0]  %s797, 16, %s4, [#allocation4]
        $region52: #{dense2sparse_semantic_idf_norm_forward.4} parent=35 // pred_fallthru
          _
        // Predicated region
        $region53: #{dense2sparse_semantic_idf_norm_forward.4} parent=35 // pred_check
          %p800 = pneg %p134
        $region54: #{dense2sparse_semantic_idf_norm_forward.4} parent=35 // pred_check_branch
          %802 = sbr.rel (%p800) target = $region56
        $region55: #{dense2sparse_semantic_idf_norm_forward.4} parent=35 // pred_region
          %803 = dma.done [#allocation4], 16
        $region56: #{dense2sparse_semantic_idf_norm_forward.4} parent=35 // pred_fallthru
          _
      $region36: #{dense2sparse_semantic_idf_norm_forward.4} parent=5 // pred_fallthru
        _
      %p804 = scmp.le.s32.totalorder 2, %s17
      // Predicated region
      $region57: #{dense2sparse_semantic_idf_norm_forward.4} parent=5 // pred_check
        %p805 = pneg %p804
      $region58: #{dense2sparse_semantic_idf_norm_forward.4} parent=5 // pred_check_branch
        %807 = sbr.rel (%p805) target = $region60
      $region59: #{dense2sparse_semantic_idf_norm_forward.4} parent=5 // pred_region
        %s808 = ssub.s32 %s17, 2
      $region60: #{dense2sparse_semantic_idf_norm_forward.4} parent=5 // pred_fallthru
        _
    $region6: #{dense2sparse_semantic_idf_norm_forward.4} parent=1 // loop_footer
      %s21 = sadd.s32 1, %s17
    $region7: #{dense2sparse_semantic_idf_norm_forward.4} parent=1 // loop_footer_branch
      %16 = sbr.rel target = $region3
    $region8: #{dense2sparse_semantic_idf_norm_forward.4} parent=1 // loop_exit
      _
    %809 = vsyncpa [#allocation3], 1
    %s810 = scalar_lea.sflag [#allocation3], 1
    %811 = vsyncpa %s810, 1
    %812 = vsyncpa [#allocation6], 1
    %s813 = scalar_lea.sflag [#allocation6], 1
    %814 = vsyncpa %s813, 1
    %815 = vsyncpa [#allocation4], 1
    %s816 = scalar_lea.sflag [#allocation4], 1
    %817 = vsyncpa %s816, 1

</llo_original>
